<compile_context>
chip_gen: v7x
topology: tpu7x:2x2x1
jax: 0.10.0
libtpu: 0.0.40
codegen_flags: <defaults>
</compile_context>

<pallas_src>
import jax
import jax.numpy as jnp
from jax.experimental import pallas as pl
from jax.experimental.pallas import tpu as pltpu


def _gsr_kernel(wl_ref, wr_ref, u_ref, f_ref, adj_ref, x_ref):
    ph = adj_ref.shape[-1]

    wl = wl_ref[...]     # (Ph, Pl)  W[:, :lr], zero-padded (shared across batch)
    wr = wr_ref[...]     # (Ph, Pl)  W[:, lr:], zero-padded (shared across batch)
    u = u_ref[0]         # (Pl, Pl)  eigenvectors of A, zero-padded
    f = f_ref[0]         # (Pl, Ph)  node features, zero-padded

    # a = W @ [I; I]  ==  W[:, :lr] + W[:, lr:]   (VPU add, no MXU matmul, no s_d DMA)
    a = wl + wr

    # b = a @ U^T  -- contract dim 1 of both operands; no transposed copy of U.
    b = jax.lax.dot_general(
        a, u, dimension_numbers=(((1,), (1,)), ((), ())),
        preferred_element_type=jnp.float32)

    # f_d = |b @ X|
    f_d = jnp.abs(jnp.dot(b, f, preferred_element_type=jnp.float32))

    # fill_diagonal_(1)  (also on padded rows -> rowsum >= 1 everywhere, outputs sliced later)
    row = jax.lax.broadcasted_iota(jnp.int32, (ph, ph), 0)
    col = jax.lax.broadcasted_iota(jnp.int32, (ph, ph), 1)
    diag = row == col
    f_d = jnp.where(diag, jnp.float32(1.0), f_d)

    # normalize_adj_torch: adj[i,j] = r[i] * f_d[j,i] * r[j],  r = rowsum^-1/2.
    # rowsum >= 1 (diag == 1, all entries |.|) so rsqrt can never produce inf -> no guard.
    rowsum = jnp.sum(f_d, axis=1, keepdims=True)   # (Ph, 1)
    r_inv = jax.lax.rsqrt(rowsum)
    adj = (f_d * r_inv).T * r_inv                  # both broadcasts stay in (Ph,1) sublane form
    adj_ref[0] = adj

    # X = adj @ adj^T (contract dim 1 of both).  Result is symmetric by construction,
    # so the reference (X + X.T)/2 is an exact no-op and is dropped.
    xx = jax.lax.dot_general(
        adj, adj, dimension_numbers=(((1,), (1,)), ((), ())),
        preferred_element_type=jnp.float32)
    xx = jnp.where(diag, jnp.float32(1.0), xx)
    x_ref[0] = jnp.abs(xx)


def _round_up(x, m):
    return ((x + m - 1) // m) * m


@jax.jit
def gsr_layer_batched(A, X, weights):
    """Batched GSRLayer forward.

    A:       (B, lr, lr)  symmetric low-res adjacency (upper triangle used, UPLO='U')
    X:       (B, lr, hr)  node features
    weights: (hr, hr)     learnable weights, hr == 2 * lr (shared across the batch)
    returns (adj, X_out), both (B, hr, hr) float32.
    """
    B, lr, _ = A.shape
    hr = weights.shape[0]
    assert hr == 2 * lr, "GSRLayer requires hr_dim == 2 * lr_dim"

    # TODO(synk): torch.linalg.eigh has no Pallas equivalent; the eigen-decomposition
    # stays in plain JAX, everything downstream runs in the kernel.
    _, U = jnp.linalg.eigh(A.astype(jnp.float32), UPLO="U", symmetrize_input=False)
    U = U.astype(jnp.float32)

    # Lane-dense padding: last two dims up to multiples of 128.  Zero padding is exact:
    # padded rows/cols contribute 0 to every contraction, padded diagonal entries are
    # forced to 1 (keeps rowsums >= 1), and outputs are sliced back to (hr, hr).
    Pl = _round_up(lr, 128)
    Ph = _round_up(hr, 128)

    w = weights.astype(jnp.float32)
    wl = jnp.pad(w[:, :lr], ((0, Ph - hr), (0, Pl - lr)))                       # (Ph, Pl)
    wr = jnp.pad(w[:, lr:], ((0, Ph - hr), (0, Pl - lr)))                       # (Ph, Pl)
    U_p = jnp.pad(U, ((0, 0), (0, Pl - lr), (0, Pl - lr)))                      # (B, Pl, Pl)
    X_p = jnp.pad(X.astype(jnp.float32), ((0, 0), (0, Pl - lr), (0, Ph - hr)))  # (B, Pl, Ph)

    adj_p, x_p = pl.pallas_call(
        _gsr_kernel,
        out_shape=(
            jax.ShapeDtypeStruct((B, Ph, Ph), jnp.float32),
            jax.ShapeDtypeStruct((B, Ph, Ph), jnp.float32),
        ),
        grid=(B,),
        in_specs=[
            pl.BlockSpec((Ph, Pl), lambda b: (0, 0)),         # W[:, :lr] padded (shared)
            pl.BlockSpec((Ph, Pl), lambda b: (0, 0)),         # W[:, lr:] padded (shared)
            pl.BlockSpec((1, Pl, Pl), lambda b: (b, 0, 0)),   # U per graph
            pl.BlockSpec((1, Pl, Ph), lambda b: (b, 0, 0)),   # X per graph
        ],
        out_specs=(
            pl.BlockSpec((1, Ph, Ph), lambda b: (b, 0, 0)),   # adj
            pl.BlockSpec((1, Ph, Ph), lambda b: (b, 0, 0)),   # X_out
        ),
        compiler_params=pltpu.CompilerParams(
            dimension_semantics=("parallel",),
        ),
    )(wl, wr, U_p, X_p)

    return adj_p[:, :hr, :hr], x_p[:, :hr, :hr]


def gsr_layer(A, X, weights):
    """Single-graph GSRLayer forward (matches the torch module signature)."""
    adj, x_out = gsr_layer_batched(A[None], X[None], weights)
    return adj[0], x_out[0]


def _gsr_reference(A, X, weights):
    """Pure-JAX reference of the torch forward (for parity checks)."""
    lr = A.shape[0]
    hr = weights.shape[0]
    _, U = jnp.linalg.eigh(A, UPLO="U", symmetrize_input=False)
    eye = jnp.eye(lr, dtype=jnp.float32)
    s_d = jnp.concatenate([eye, eye], axis=0)
    a = weights @ s_d
    b = a @ U.T
    f_d = jnp.abs(b @ X)
    f_d = f_d.at[jnp.arange(hr), jnp.arange(hr)].set(1.0)
    r = jnp.sum(f_d, axis=1) ** -0.5
    r = jnp.where(jnp.isinf(r), 0.0, r)
    adj = (f_d * r[None, :]).T * r[None, :]
    xx = adj @ adj.T
    xx = (xx + xx.T) * 0.5
    xx = xx.at[jnp.arange(hr), jnp.arange(hr)].set(1.0)
    return adj, jnp.abs(xx)


if __name__ == "__main__":
    lr_dim = 16
    hr_dim = 32   # hr_dim == 2 * lr_dim, as required by the W @ [I; I] structure
    batch = 2

    key = jax.random.PRNGKey(0)
    k_a, k_x, k_w = jax.random.split(key, 3)

    # Symmetric low-res adjacencies.
    M = jax.random.normal(k_a, (batch, lr_dim, lr_dim), dtype=jnp.float32)
    A = (M + jnp.swapaxes(M, -1, -2)) * 0.5
    # Node features (batch, lr_dim, hr_dim).
    X = jax.random.normal(k_x, (batch, lr_dim, hr_dim), dtype=jnp.float32)

    # Deterministic init mirroring: 2*r*randn((hr,hr)) + r, r = sqrt(6/(hr+hr)).
    r = jnp.sqrt(6.0 / (hr_dim + hr_dim)).astype(jnp.float32)
    weights = 2.0 * r * jax.random.normal(k_w, (hr_dim, hr_dim), dtype=jnp.float32) + r

    adj, x_out = gsr_layer_batched(A, X, weights)
    jax.block_until_ready((adj, x_out))

    assert adj.shape == (batch, hr_dim, hr_dim)
    assert x_out.shape == (batch, hr_dim, hr_dim)
    assert bool(jnp.all(jnp.isfinite(adj))) and bool(jnp.all(jnp.isfinite(x_out)))

    # Parity against the pure-JAX reference of the torch semantics.
    for b in range(batch):
        adj_ref, x_ref = _gsr_reference(A[b], X[b], weights)
        assert bool(jnp.allclose(adj[b], adj_ref, rtol=1e-4, atol=1e-4))
        assert bool(jnp.allclose(x_out[b], x_ref, rtol=1e-4, atol=1e-4))

    # Structural invariants of the torch module.
    assert bool(jnp.allclose(jnp.diagonal(x_out, axis1=-2, axis2=-1), 1.0))
    assert bool(jnp.allclose(x_out, jnp.swapaxes(x_out, -1, -2), atol=1e-6))
    assert bool(jnp.all(x_out >= 0.0))

    print("KERNEL_OK")
</pallas_src>

<mosaic_0001>
module attributes {stable_mosaic.version = 11 : i64} {
  func.func @_gsr_kernel(%arg0: i32, %arg1: memref<128x128xf32, #tpu.memory_space<vmem>>, %arg2: memref<128x128xf32, #tpu.memory_space<vmem>>, %arg3: memref<1x128x128xf32, #tpu.memory_space<vmem>>, %arg4: memref<1x128x128xf32, #tpu.memory_space<vmem>>, %arg5: memref<1x128x128xf32, #tpu.memory_space<vmem>>, %arg6: memref<1x128x128xf32, #tpu.memory_space<vmem>>) attributes {dimension_semantics = [#tpu.dimension_semantics<parallel>], iteration_bounds = array<i64: 2>, scalar_prefetch = 0 : i64, scratch_operands = 0 : i64, tpu.core_type = #tpu.core_type<tc>, window_params = [{pipeline_mode = #tpu.pipeline_mode<synchronous>, transform_indices = @transform_0, window_bounds = array<i64: 128, 128>}, {pipeline_mode = #tpu.pipeline_mode<synchronous>, transform_indices = @transform_1, window_bounds = array<i64: 128, 128>}, {transform_indices = @transform_2, window_bounds = array<i64: 1, 128, 128>}, {transform_indices = @transform_3, window_bounds = array<i64: 1, 128, 128>}, {transform_indices = @transform_4, window_bounds = array<i64: 1, 128, 128>}, {transform_indices = @transform_5, window_bounds = array<i64: 1, 128, 128>}]} {
    %c0 = arith.constant 0 : index
    %c0_0 = arith.constant 0 : index
    %0 = vector.load %arg1[%c0, %c0_0] : memref<128x128xf32, #tpu.memory_space<vmem>>, vector<128x128xf32>
    %c0_1 = arith.constant 0 : index
    %c0_2 = arith.constant 0 : index
    %1 = vector.load %arg2[%c0_1, %c0_2] : memref<128x128xf32, #tpu.memory_space<vmem>>, vector<128x128xf32>
    %c0_3 = arith.constant 0 : index
    %c0_4 = arith.constant 0 : index
    %c0_5 = arith.constant 0 : index
    %2 = vector.load %arg3[%c0_3, %c0_4, %c0_5] : memref<1x128x128xf32, #tpu.memory_space<vmem>>, vector<1x128x128xf32>
    %3 = vector.shape_cast %2 : vector<1x128x128xf32> to vector<128x128xf32>
    %c0_6 = arith.constant 0 : index
    %c0_7 = arith.constant 0 : index
    %c0_8 = arith.constant 0 : index
    %4 = vector.load %arg4[%c0_6, %c0_7, %c0_8] : memref<1x128x128xf32, #tpu.memory_space<vmem>>, vector<1x128x128xf32>
    %5 = vector.shape_cast %4 : vector<1x128x128xf32> to vector<128x128xf32>
    %6 = arith.addf %0, %1 : vector<128x128xf32>
    %cst = arith.constant dense<0.000000e+00> : vector<128x128xf32>
    %7 = tpu.matmul %6, %3, %cst {dimension_numbers = #tpu.dot_dimension_numbers<[1], [1], [0], [0], [0, 0, 1, 0], [], []>} : vector<128x128xf32>, vector<128x128xf32>, vector<128x128xf32> -> vector<128x128xf32>
    %cst_9 = arith.constant dense<0.000000e+00> : vector<128x128xf32>
    %8 = tpu.matmul %7, %5, %cst_9 {dimension_numbers = #tpu.dot_dimension_numbers<[1], [0], [0], [1], [0, 0, 1, 1], [], []>} : vector<128x128xf32>, vector<128x128xf32>, vector<128x128xf32> -> vector<128x128xf32>
    %9 = math.absf %8 : vector<128x128xf32>
    %10 = tpu.iota {dimensions = array<i32: 0>} : vector<128x128xi32>
    %11 = tpu.iota {dimensions = array<i32: 1>} : vector<128x128xi32>
    %12 = arith.cmpi eq, %10, %11 : vector<128x128xi32>
    %cst_10 = arith.constant 1.000000e+00 : f32
    %13 = vector.broadcast %cst_10 : f32 to vector<128x128xf32>
    %14 = arith.select %12, %13, %9 : vector<128x128xi1>, vector<128x128xf32>
    %cst_11 = arith.constant dense<0.000000e+00> : vector<128xf32>
    %15 = vector.multi_reduction <add>, %14, %cst_11 [1] : vector<128x128xf32> to vector<128xf32>
    %16 = vector.shape_cast %15 : vector<128xf32> to vector<128x1xf32>
    %17 = math.rsqrt %16 : vector<128x1xf32>
    %18 = vector.broadcast %17 : vector<128x1xf32> to vector<128x128xf32>
    %19 = arith.mulf %14, %18 : vector<128x128xf32>
    %20 = tpu.transpose %19, [1, 0] : vector<128x128xf32> -> vector<128x128xf32>
    %21 = vector.broadcast %17 : vector<128x1xf32> to vector<128x128xf32>
    %22 = arith.mulf %20, %21 : vector<128x128xf32>
    %c0_12 = arith.constant 0 : index
    %c0_13 = arith.constant 0 : index
    %c0_14 = arith.constant 0 : index
    %23 = vector.load %arg5[%c0_12, %c0_13, %c0_14] : memref<1x128x128xf32, #tpu.memory_space<vmem>>, vector<1x128x128xf32>
    %24 = vector.shape_cast %23 : vector<1x128x128xf32> to vector<128x128xf32>
    %25 = vector.shape_cast %22 : vector<128x128xf32> to vector<1x128x128xf32>
    tpu.vector_store %arg5[%c0_12, %c0_13, %c0_14], %25 {strides = array<i32>} : memref<1x128x128xf32, #tpu.memory_space<vmem>>, vector<1x128x128xf32>,
    %cst_15 = arith.constant dense<0.000000e+00> : vector<128x128xf32>
    %26 = tpu.matmul %22, %22, %cst_15 {dimension_numbers = #tpu.dot_dimension_numbers<[1], [1], [0], [0], [0, 0, 1, 0], [], []>} : vector<128x128xf32>, vector<128x128xf32>, vector<128x128xf32> -> vector<128x128xf32>
    %cst_16 = arith.constant 1.000000e+00 : f32
    %27 = vector.broadcast %cst_16 : f32 to vector<128x128xf32>
    %28 = arith.select %12, %27, %26 : vector<128x128xi1>, vector<128x128xf32>
    %29 = math.absf %28 : vector<128x128xf32>
    %c0_17 = arith.constant 0 : index
    %c0_18 = arith.constant 0 : index
    %c0_19 = arith.constant 0 : index
    %30 = vector.load %arg6[%c0_17, %c0_18, %c0_19] : memref<1x128x128xf32, #tpu.memory_space<vmem>>, vector<1x128x128xf32>
    %31 = vector.shape_cast %30 : vector<1x128x128xf32> to vector<128x128xf32>
    %32 = vector.shape_cast %29 : vector<128x128xf32> to vector<1x128x128xf32>
    tpu.vector_store %arg6[%c0_17, %c0_18, %c0_19], %32 {strides = array<i32>} : memref<1x128x128xf32, #tpu.memory_space<vmem>>, vector<1x128x128xf32>,
    return
  }
  func.func @transform_0(%arg0: i32) -> (i32, i32) {
    %c0_i32 = arith.constant 0 : i32
    %c0_i32_0 = arith.constant 0 : i32
    %c0_i32_1 = arith.constant 0 : i32
    return %c0_i32, %c0_i32_0 : i32, i32
  }
  func.func @transform_1(%arg0: i32) -> (i32, i32) {
    %c0_i32 = arith.constant 0 : i32
    %c0_i32_0 = arith.constant 0 : i32
    %c0_i32_1 = arith.constant 0 : i32
    return %c0_i32, %c0_i32_0 : i32, i32
  }
  func.func @transform_2(%arg0: i32) -> (i32, i32, i32) {
    %c0_i32 = arith.constant 0 : i32
    %c0_i32_0 = arith.constant 0 : i32
    %c0_i32_1 = arith.constant 0 : i32
    return %arg0, %c0_i32, %c0_i32_0 : i32, i32, i32
  }
  func.func @transform_3(%arg0: i32) -> (i32, i32, i32) {
    %c0_i32 = arith.constant 0 : i32
    %c0_i32_0 = arith.constant 0 : i32
    %c0_i32_1 = arith.constant 0 : i32
    return %arg0, %c0_i32, %c0_i32_0 : i32, i32, i32
  }
  func.func @transform_4(%arg0: i32) -> (i32, i32, i32) {
    %c0_i32 = arith.constant 0 : i32
    %c0_i32_0 = arith.constant 0 : i32
    %c0_i32_1 = arith.constant 0 : i32
    return %arg0, %c0_i32, %c0_i32_0 : i32, i32, i32
  }
  func.func @transform_5(%arg0: i32) -> (i32, i32, i32) {
    %c0_i32 = arith.constant 0 : i32
    %c0_i32_0 = arith.constant 0 : i32
    %c0_i32_1 = arith.constant 0 : i32
    return %arg0, %c0_i32, %c0_i32_0 : i32, i32, i32
  }
}

</mosaic_0001>

<llo_original>
// kernel: custom-call.2
$region0: #{custom-call.2}
  %s0 = inlined_call_operand.vmem [shape: f32[2,8,8], index: 0, kind: input, shape index: {}]
  %s1 = inlined_call_operand.vmem [shape: f32[2,8,8], index: 1, kind: input, shape index: {}]
  %s2 = inlined_call_operand.vmem [shape: f32[2,8,8], index: 2, kind: input, shape index: {}]
  %s3 = inlined_call_operand.vmem [shape: f32[2,8,8], index: 3, kind: input, shape index: {}]
  %s4 = inlined_call_operand.vmem [shape: f32[2,8], index: 4, kind: output, shape index: {0}]
  %s5 = inlined_call_operand.vmem [shape: f32[2,8], index: 5, kind: output, shape index: {1}]
  %s6 = inlined_call_operand.vmem [shape: f32[2,8,8], index: 6, kind: output, shape index: {2}]
  %s7 = inlined_call_operand.vmem [shape: f32[2,8,8], index: 7, kind: output, shape index: {3}]
  %s8 = inlined_call_operand.vmem [shape: f32[2,8,8], index: 8, kind: output, shape index: {4}]
  %s9 = inlined_call_operand.vmem [shape: f32[2,8,8], index: 9, kind: output, shape index: {5}]
  %10 = xla_tuple %s4, %s5, %s6, %s7, %s8, %s9
  $region1: #{custom-call.2} parent=0
    #allocation0 [shape = 'u8[8192]{0}', space=vmem, size = 0x2000, scoped, tag = 'operand span for operand 0']
    #allocation1 [shape = 'u8[8192]{0}', space=vmem, size = 0x2000, scoped, tag = 'operand span for operand 1']
    #allocation2 [shape = 'u8[8192]{0}', space=vmem, size = 0x2000, scoped, tag = 'operand span for operand 2']
    #allocation3 [shape = 'u8[8192]{0}', space=vmem, size = 0x2000, scoped, tag = 'operand span for operand 3']
    #allocation4 [shape = 'u8[4096]{0}', space=vmem, size = 0x1000, scoped, tag = 'operand span for operand 4']
    #allocation5 [shape = 'u8[2048]{0}', space=vmem, size = 0x800, scoped, tag = 'packed  for operand 4']
    #allocation6 [shape = 'u8[4096]{0}', space=vmem, size = 0x1000, scoped, tag = 'operand span for operand 5']
    #allocation7 [shape = 'u8[2048]{0}', space=vmem, size = 0x800, scoped, tag = 'packed  for operand 5']
    #allocation8 [shape = 'u8[8192]{0}', space=vmem, size = 0x2000, scoped, tag = 'operand span for operand 6']
    #allocation9 [shape = 'u8[8192]{0}', space=vmem, size = 0x2000, scoped, tag = 'operand span for operand 7']
    #allocation10 [shape = 'u8[8192]{0}', space=vmem, size = 0x2000, scoped, tag = 'operand span for operand 8']
    #allocation11 [shape = 'u8[8192]{0}', space=vmem, size = 0x2000, scoped, tag = 'operand span for operand 9']
    loop: start=0, step=1, limit=4
    $region2: #{custom-call.2} parent=1 // loop_pre_header
      _
    $region3: #{custom-call.2} parent=1 // loop_header
      %s12 = sphi 0, %s16
      %p13 = scmp.ge.s32.totalorder %s12, 4
      %s24 = sphi 0, %s26
      %s27 = sphi 0, %s24
      %s28 = sphi 0, %s27
      %s44 = sphi 0, %s28
      %s52 = sphi 0, %s54
      %s55 = sphi 0, %s52
      %s56 = sphi 0, %s55
      %s72 = sphi 0, %s56
    $region4: #{custom-call.2} parent=1 // loop_header_branch
      %15 = sbr.rel (%p13) target = $region8
    $region5: #{custom-call.2} parent=1 // loop_body
      %s17 = ssub.s32 %s12, 1
      %s18 = ssub.s32 %s12, 2
      %s19 = sadd.s32 %s12, 1
      %s20 = sshrl.u32 %s12, 3
      %s21 = sshrl.u32 %s19, 3
      %s22 = ssub.s32 %s20, %s21
      %p23 = scmp.eq.s32.totalorder %s22, 0
      %s25 = sadd.s32 %s24, 1
      %s26 = scalar_select %p23, %s24, %s25
      %p29 = pneg %p23
      %p30 = scmp.eq.s32.totalorder %s12, 1
      %p31 = por %p29, %p30
      %p32 = scmp.ne.s32.totalorder %s24, %s27
      %p33 = scmp.eq.s32.totalorder %s12, 0
      %p34 = por %p32, %p33
      %p35 = scmp.ne.s32.totalorder %s24, %s27
      %p36 = scmp.eq.s32.totalorder %s17, 1
      %p37 = por %p35, %p36
      %p38 = scmp.ne.s32.totalorder %s27, %s28
      %p39 = scmp.eq.s32.totalorder %s17, 0
      %p40 = por %p38, %p39
      %p41 = scmp.ne.s32.totalorder %s27, %s28
      %p42 = scmp.eq.s32.totalorder %s18, 1
      %p43 = por %p41, %p42
      %p45 = scmp.ne.s32.totalorder %s28, %s44
      %p46 = scmp.eq.s32.totalorder %s18, 0
      %p47 = por %p45, %p46
      %s48 = sshrl.u32 %s12, 3
      %s49 = sshrl.u32 %s19, 3
      %s50 = ssub.s32 %s48, %s49
      %p51 = scmp.eq.s32.totalorder %s50, 0
      %s53 = sadd.s32 %s52, 1
      %s54 = scalar_select %p51, %s52, %s53
      %p57 = pneg %p51
      %p58 = scmp.eq.s32.totalorder %s12, 1
      %p59 = por %p57, %p58
      %p60 = scmp.ne.s32.totalorder %s52, %s55
      %p61 = scmp.eq.s32.totalorder %s12, 0
      %p62 = por %p60, %p61
      %p63 = scmp.ne.s32.totalorder %s52, %s55
      %p64 = scmp.eq.s32.totalorder %s17, 1
      %p65 = por %p63, %p64
      %p66 = scmp.ne.s32.totalorder %s55, %s56
      %p67 = scmp.eq.s32.totalorder %s17, 0
      %p68 = por %p66, %p67
      %p69 = scmp.ne.s32.totalorder %s55, %s56
      %p70 = scmp.eq.s32.totalorder %s18, 1
      %p71 = por %p69, %p70
      %p73 = scmp.ne.s32.totalorder %s56, %s72
      %p74 = scmp.eq.s32.totalorder %s18, 0
      %p75 = por %p73, %p74
      %p76 = scmp.le.s32.totalorder 1, %s12
      %p77 = scmp.lt.s32.totalorder %s12, 3
      %p78 = pnand %p76, %p77
      %p79 = pneg %p78
      // Predicated region
      $region9: #{custom-call.2} parent=5 // pred_check
        _
      $region10: #{custom-call.2} parent=5 // pred_check_branch
        %81 = sbr.rel (%p78) target = $region12
      $region11: #{custom-call.2} parent=5 // pred_region
        %s82 = ssub.s32 %s12, 1
      $region12: #{custom-call.2} parent=5 // pred_fallthru
        _
      %p83 = scmp.lt.s32.totalorder %s12, 2
      // Predicated region
      $region13: #{custom-call.2} parent=5 // pred_check
        %p84 = pneg %p83
      $region14: #{custom-call.2} parent=5 // pred_check_branch
        %86 = sbr.rel (%p84) target = $region16
      $region15: #{custom-call.2} parent=5 // pred_region
        %s87 = sand.u32 %s12, 1
        %s88 = sand.u32 %s12, 1
        %s89 = smul.addr %s88, 8
        %s90 = scalar_lea.vmem [#allocation0], %s89
        %s91 = smul.addr %s12, 8
        %s92 = scalar_lea.vmem %s0, %s91
        // Predicated region
        $region17: #{custom-call.2} parent=15 // pred_check
          _
        $region18: #{custom-call.2} parent=15 // pred_check_branch
          %94 = sbr.rel (0) target = $region20
        $region19: #{custom-call.2} parent=15 // pred_region
          // Predicated region
          $region21: #{custom-call.2} parent=19 // pred_check
            _
          $region22: #{custom-call.2} parent=19 // pred_check_branch
            %96 = sbr.rel (0) target = $region24
          $region23: #{custom-call.2} parent=19 // pred_region
            // Predicated region
            $region36: #{custom-call.2} parent=23 // pred_check
              _
            $region37: #{custom-call.2} parent=23 // pred_check_branch
              %111 = sbr.rel (0) target = $region39
            $region38: #{custom-call.2} parent=23 // pred_region
              loop: start=0, step=1, limit=1
              $region40: #{custom-call.2} parent=38 // loop_pre_header
                _
              $region41: #{custom-call.2} parent=38 // loop_header
                %s113 = sphi 0, %s117
                %p114 = scmp.ge.s32.totalorder %s113, 1
                %s118 = sphi %s92, %s92
                %s119 = sphi %s90, %s90
              $region42: #{custom-call.2} parent=38 // loop_header_branch
                %116 = sbr.rel (%p114) target = $region46
              $region43: #{custom-call.2} parent=38 // loop_body
                %v120 = vld [vmem:[%s118] sm:$0xff]
                %121 = vst [vmem:[%s119] sm:$0xff] %v120
              $region44: #{custom-call.2} parent=38 // loop_footer
                %s117 = sadd.s32 1, %s113
              $region45: #{custom-call.2} parent=38 // loop_footer_branch
                %112 = sbr.rel target = $region41
              $region46: #{custom-call.2} parent=38 // loop_exit
                _
            $region39: #{custom-call.2} parent=23 // pred_fallthru
              _
            // Predicated region
            $region47: #{custom-call.2} parent=23 // pred_check
              _
            $region48: #{custom-call.2} parent=23 // pred_check_branch
              %123 = sbr.rel target = $region50
            $region49: #{custom-call.2} parent=23 // pred_region
              _
            $region50: #{custom-call.2} parent=23 // pred_fallthru
              _
          $region24: #{custom-call.2} parent=19 // pred_fallthru
            _
          // Predicated region
          $region25: #{custom-call.2} parent=19 // pred_check
            _
          $region26: #{custom-call.2} parent=19 // pred_check_branch
            %98 = sbr.rel target = $region28
          $region27: #{custom-call.2} parent=19 // pred_region
            loop: start=0, step=1, limit=1
            $region29: #{custom-call.2} parent=27 // loop_pre_header
              _
            $region30: #{custom-call.2} parent=27 // loop_header
              %s101 = sphi 0, %s105
              %p102 = scmp.ge.s32.totalorder %s101, 1
              %s106 = sphi %s92, %s92
              %s107 = sphi %s90, %s90
            $region31: #{custom-call.2} parent=27 // loop_header_branch
              %104 = sbr.rel (%p102) target = $region35
            $region32: #{custom-call.2} parent=27 // loop_body
              %v108 = vld [vmem:[%s106] sm:$0xff]
              %109 = vst [vmem:[%s107] sm:$0xff] %v108
            $region33: #{custom-call.2} parent=27 // loop_footer
              %s105 = sadd.s32 1, %s101
            $region34: #{custom-call.2} parent=27 // loop_footer_branch
              %100 = sbr.rel target = $region30
            $region35: #{custom-call.2} parent=27 // loop_exit
              _
          $region28: #{custom-call.2} parent=19 // pred_fallthru
            _
        $region20: #{custom-call.2} parent=15 // pred_fallthru
          _
        %124 = vnop
        %s125 = sand.u32 %s12, 1
        %s126 = sand.u32 %s12, 1
        %s127 = smul.addr %s126, 8
        %s128 = scalar_lea.vmem [#allocation1], %s127
        %s129 = smul.addr %s12, 8
        %s130 = scalar_lea.vmem %s1, %s129
        // Predicated region
        $region51: #{custom-call.2} parent=15 // pred_check
          _
        $region52: #{custom-call.2} parent=15 // pred_check_branch
          %132 = sbr.rel (0) target = $region54
        $region53: #{custom-call.2} parent=15 // pred_region
          // Predicated region
          $region55: #{custom-call.2} parent=53 // pred_check
            _
          $region56: #{custom-call.2} parent=53 // pred_check_branch
            %134 = sbr.rel (0) target = $region58
          $region57: #{custom-call.2} parent=53 // pred_region
            // Predicated region
            $region70: #{custom-call.2} parent=57 // pred_check
              _
            $region71: #{custom-call.2} parent=57 // pred_check_branch
              %149 = sbr.rel (0) target = $region73
            $region72: #{custom-call.2} parent=57 // pred_region
              loop: start=0, step=1, limit=1
              $region74: #{custom-call.2} parent=72 // loop_pre_header
                _
              $region75: #{custom-call.2} parent=72 // loop_header
                %s151 = sphi 0, %s155
                %p152 = scmp.ge.s32.totalorder %s151, 1
                %s156 = sphi %s130, %s130
                %s157 = sphi %s128, %s128
              $region76: #{custom-call.2} parent=72 // loop_header_branch
                %154 = sbr.rel (%p152) target = $region80
              $region77: #{custom-call.2} parent=72 // loop_body
                %v158 = vld [vmem:[%s156] sm:$0xff]
                %159 = vst [vmem:[%s157] sm:$0xff] %v158
              $region78: #{custom-call.2} parent=72 // loop_footer
                %s155 = sadd.s32 1, %s151
              $region79: #{custom-call.2} parent=72 // loop_footer_branch
                %150 = sbr.rel target = $region75
              $region80: #{custom-call.2} parent=72 // loop_exit
                _
            $region73: #{custom-call.2} parent=57 // pred_fallthru
              _
            // Predicated region
            $region81: #{custom-call.2} parent=57 // pred_check
              _
            $region82: #{custom-call.2} parent=57 // pred_check_branch
              %161 = sbr.rel target = $region84
            $region83: #{custom-call.2} parent=57 // pred_region
              _
            $region84: #{custom-call.2} parent=57 // pred_fallthru
              _
          $region58: #{custom-call.2} parent=53 // pred_fallthru
            _
          // Predicated region
          $region59: #{custom-call.2} parent=53 // pred_check
            _
          $region60: #{custom-call.2} parent=53 // pred_check_branch
            %136 = sbr.rel target = $region62
          $region61: #{custom-call.2} parent=53 // pred_region
            loop: start=0, step=1, limit=1
            $region63: #{custom-call.2} parent=61 // loop_pre_header
              _
            $region64: #{custom-call.2} parent=61 // loop_header
              %s139 = sphi 0, %s143
              %p140 = scmp.ge.s32.totalorder %s139, 1
              %s144 = sphi %s130, %s130
              %s145 = sphi %s128, %s128
            $region65: #{custom-call.2} parent=61 // loop_header_branch
              %142 = sbr.rel (%p140) target = $region69
            $region66: #{custom-call.2} parent=61 // loop_body
              %v146 = vld [vmem:[%s144] sm:$0xff]
              %147 = vst [vmem:[%s145] sm:$0xff] %v146
            $region67: #{custom-call.2} parent=61 // loop_footer
              %s143 = sadd.s32 1, %s139
            $region68: #{custom-call.2} parent=61 // loop_footer_branch
              %138 = sbr.rel target = $region64
            $region69: #{custom-call.2} parent=61 // loop_exit
              _
          $region62: #{custom-call.2} parent=53 // pred_fallthru
            _
        $region54: #{custom-call.2} parent=15 // pred_fallthru
          _
        %162 = vnop
        %s163 = sand.u32 %s12, 1
        %s164 = sand.u32 %s12, 1
        %s165 = smul.addr %s164, 8
        %s166 = scalar_lea.vmem [#allocation2], %s165
        %s167 = smul.addr %s12, 8
        %s168 = scalar_lea.vmem %s2, %s167
        // Predicated region
        $region85: #{custom-call.2} parent=15 // pred_check
          _
        $region86: #{custom-call.2} parent=15 // pred_check_branch
          %170 = sbr.rel (0) target = $region88
        $region87: #{custom-call.2} parent=15 // pred_region
          // Predicated region
          $region89: #{custom-call.2} parent=87 // pred_check
            _
          $region90: #{custom-call.2} parent=87 // pred_check_branch
            %172 = sbr.rel (0) target = $region92
          $region91: #{custom-call.2} parent=87 // pred_region
            // Predicated region
            $region104: #{custom-call.2} parent=91 // pred_check
              _
            $region105: #{custom-call.2} parent=91 // pred_check_branch
              %187 = sbr.rel (0) target = $region107
            $region106: #{custom-call.2} parent=91 // pred_region
              loop: start=0, step=1, limit=1
              $region108: #{custom-call.2} parent=106 // loop_pre_header
                _
              $region109: #{custom-call.2} parent=106 // loop_header
                %s189 = sphi 0, %s193
                %p190 = scmp.ge.s32.totalorder %s189, 1
                %s194 = sphi %s168, %s168
                %s195 = sphi %s166, %s166
              $region110: #{custom-call.2} parent=106 // loop_header_branch
                %192 = sbr.rel (%p190) target = $region114
              $region111: #{custom-call.2} parent=106 // loop_body
                %v196 = vld [vmem:[%s194] sm:$0xff]
                %197 = vst [vmem:[%s195] sm:$0xff] %v196
              $region112: #{custom-call.2} parent=106 // loop_footer
                %s193 = sadd.s32 1, %s189
              $region113: #{custom-call.2} parent=106 // loop_footer_branch
                %188 = sbr.rel target = $region109
              $region114: #{custom-call.2} parent=106 // loop_exit
                _
            $region107: #{custom-call.2} parent=91 // pred_fallthru
              _
            // Predicated region
            $region115: #{custom-call.2} parent=91 // pred_check
              _
            $region116: #{custom-call.2} parent=91 // pred_check_branch
              %199 = sbr.rel target = $region118
            $region117: #{custom-call.2} parent=91 // pred_region
              _
            $region118: #{custom-call.2} parent=91 // pred_fallthru
              _
          $region92: #{custom-call.2} parent=87 // pred_fallthru
            _
          // Predicated region
          $region93: #{custom-call.2} parent=87 // pred_check
            _
          $region94: #{custom-call.2} parent=87 // pred_check_branch
            %174 = sbr.rel target = $region96
          $region95: #{custom-call.2} parent=87 // pred_region
            loop: start=0, step=1, limit=1
            $region97: #{custom-call.2} parent=95 // loop_pre_header
              _
            $region98: #{custom-call.2} parent=95 // loop_header
              %s177 = sphi 0, %s181
              %p178 = scmp.ge.s32.totalorder %s177, 1
              %s182 = sphi %s168, %s168
              %s183 = sphi %s166, %s166
            $region99: #{custom-call.2} parent=95 // loop_header_branch
              %180 = sbr.rel (%p178) target = $region103
            $region100: #{custom-call.2} parent=95 // loop_body
              %v184 = vld [vmem:[%s182] sm:$0xff]
              %185 = vst [vmem:[%s183] sm:$0xff] %v184
            $region101: #{custom-call.2} parent=95 // loop_footer
              %s181 = sadd.s32 1, %s177
            $region102: #{custom-call.2} parent=95 // loop_footer_branch
              %176 = sbr.rel target = $region98
            $region103: #{custom-call.2} parent=95 // loop_exit
              _
          $region96: #{custom-call.2} parent=87 // pred_fallthru
            _
        $region88: #{custom-call.2} parent=15 // pred_fallthru
          _
        %200 = vnop
        %s201 = sand.u32 %s12, 1
        %s202 = sand.u32 %s12, 1
        %s203 = smul.addr %s202, 8
        %s204 = scalar_lea.vmem [#allocation3], %s203
        %s205 = smul.addr %s12, 8
        %s206 = scalar_lea.vmem %s3, %s205
        // Predicated region
        $region119: #{custom-call.2} parent=15 // pred_check
          _
        $region120: #{custom-call.2} parent=15 // pred_check_branch
          %208 = sbr.rel (0) target = $region122
        $region121: #{custom-call.2} parent=15 // pred_region
          // Predicated region
          $region123: #{custom-call.2} parent=121 // pred_check
            _
          $region124: #{custom-call.2} parent=121 // pred_check_branch
            %210 = sbr.rel (0) target = $region126
          $region125: #{custom-call.2} parent=121 // pred_region
            // Predicated region
            $region138: #{custom-call.2} parent=125 // pred_check
              _
            $region139: #{custom-call.2} parent=125 // pred_check_branch
              %225 = sbr.rel (0) target = $region141
            $region140: #{custom-call.2} parent=125 // pred_region
              loop: start=0, step=1, limit=1
              $region142: #{custom-call.2} parent=140 // loop_pre_header
                _
              $region143: #{custom-call.2} parent=140 // loop_header
                %s227 = sphi 0, %s231
                %p228 = scmp.ge.s32.totalorder %s227, 1
                %s232 = sphi %s206, %s206
                %s233 = sphi %s204, %s204
              $region144: #{custom-call.2} parent=140 // loop_header_branch
                %230 = sbr.rel (%p228) target = $region148
              $region145: #{custom-call.2} parent=140 // loop_body
                %v234 = vld [vmem:[%s232] sm:$0xff]
                %235 = vst [vmem:[%s233] sm:$0xff] %v234
              $region146: #{custom-call.2} parent=140 // loop_footer
                %s231 = sadd.s32 1, %s227
              $region147: #{custom-call.2} parent=140 // loop_footer_branch
                %226 = sbr.rel target = $region143
              $region148: #{custom-call.2} parent=140 // loop_exit
                _
            $region141: #{custom-call.2} parent=125 // pred_fallthru
              _
            // Predicated region
            $region149: #{custom-call.2} parent=125 // pred_check
              _
            $region150: #{custom-call.2} parent=125 // pred_check_branch
              %237 = sbr.rel target = $region152
            $region151: #{custom-call.2} parent=125 // pred_region
              _
            $region152: #{custom-call.2} parent=125 // pred_fallthru
              _
          $region126: #{custom-call.2} parent=121 // pred_fallthru
            _
          // Predicated region
          $region127: #{custom-call.2} parent=121 // pred_check
            _
          $region128: #{custom-call.2} parent=121 // pred_check_branch
            %212 = sbr.rel target = $region130
          $region129: #{custom-call.2} parent=121 // pred_region
            loop: start=0, step=1, limit=1
            $region131: #{custom-call.2} parent=129 // loop_pre_header
              _
            $region132: #{custom-call.2} parent=129 // loop_header
              %s215 = sphi 0, %s219
              %p216 = scmp.ge.s32.totalorder %s215, 1
              %s220 = sphi %s206, %s206
              %s221 = sphi %s204, %s204
            $region133: #{custom-call.2} parent=129 // loop_header_branch
              %218 = sbr.rel (%p216) target = $region137
            $region134: #{custom-call.2} parent=129 // loop_body
              %v222 = vld [vmem:[%s220] sm:$0xff]
              %223 = vst [vmem:[%s221] sm:$0xff] %v222
            $region135: #{custom-call.2} parent=129 // loop_footer
              %s219 = sadd.s32 1, %s215
            $region136: #{custom-call.2} parent=129 // loop_footer_branch
              %214 = sbr.rel target = $region132
            $region137: #{custom-call.2} parent=129 // loop_exit
              _
          $region130: #{custom-call.2} parent=121 // pred_fallthru
            _
        $region122: #{custom-call.2} parent=15 // pred_fallthru
          _
        %238 = vnop
      $region16: #{custom-call.2} parent=5 // pred_fallthru
        _
      %p239 = scmp.le.s32.totalorder 1, %s12
      %p240 = scmp.lt.s32.totalorder %s12, 3
      %p241 = pnand %p239, %p240
      %p242 = pneg %p241
      // Predicated region
      $region153: #{custom-call.2} parent=5 // pred_check
        _
      $region154: #{custom-call.2} parent=5 // pred_check_branch
        %244 = sbr.rel (%p241) target = $region156
      $region155: #{custom-call.2} parent=5 // pred_region
        #allocation12 [shape = 'f32[8,8]{1,0}', space=vmem, size = 0x1000, scoped, tag = 'a top-left matrix']
        #allocation13 [shape = 'f32[8,8]{1,0}', space=vmem, size = 0x1000, scoped, tag = 'a top-right matrix']
        #allocation14 [shape = 'f32[8,8]{1,0}', space=vmem, size = 0x1000, scoped, tag = 'a bottom-left matrix']
        #allocation15 [shape = 'f32[8,8]{1,0}', space=vmem, size = 0x1000, scoped, tag = 'a bottom-right matrix']
        %s245 = ssub.s32 %s12, 1
        %s246 = sand.u32 %s17, 1
        %s247 = sand.u32 %s17, 1
        %s248 = smul.addr %s247, 8
        %s249 = scalar_lea.vmem [#allocation0], %s248
        %s250 = sand.u32 %s17, 1
        %s251 = sand.u32 %s17, 1
        %s252 = smul.addr %s251, 8
        %s253 = scalar_lea.vmem [#allocation1], %s252
        %s254 = sand.u32 %s17, 1
        %s255 = sand.u32 %s17, 1
        %s256 = smul.addr %s255, 8
        %s257 = scalar_lea.vmem [#allocation2], %s256
        %s258 = sand.u32 %s17, 1
        %s259 = sand.u32 %s17, 1
        %s260 = smul.addr %s259, 8
        %s261 = scalar_lea.vmem [#allocation3], %s260
        %s262 = sand.u32 %s17, 1
        %s263 = sand.u32 %s17, 1
        %s264 = smul.addr %s263, 8
        %s265 = scalar_lea.vmem [#allocation0], %s264
        %s266 = sand.u32 %s17, 1
        %s267 = sand.u32 %s17, 1
        %s268 = smul.addr %s267, 8
        %s269 = scalar_lea.vmem [#allocation1], %s268
        %s270 = sand.u32 %s17, 1
        %s271 = sand.u32 %s17, 1
        %s272 = smul.addr %s271, 8
        %s273 = scalar_lea.vmem [#allocation2], %s272
        %s274 = sand.u32 %s17, 1
        %s275 = sand.u32 %s17, 1
        %s276 = smul.addr %s275, 8
        %s277 = scalar_lea.vmem [#allocation3], %s276
        %p278 = pneg %p40
        %p279 = pneg %p37
        %s280 = sand.u32 %s27, 1
        %s281 = sand.u32 %s27, 1
        %s282 = smul.addr %s281, 2
        %s283 = scalar_lea.vmem [#allocation5], %s282
        %p284 = pneg %p68
        %p285 = pneg %p65
        %s286 = sand.u32 %s55, 1
        %s287 = sand.u32 %s55, 1
        %s288 = smul.addr %s287, 2
        %s289 = scalar_lea.vmem [#allocation7], %s288
        %s290 = sand.u32 %s17, 1
        %s291 = sand.u32 %s17, 1
        %s292 = smul.addr %s291, 8
        %s293 = scalar_lea.vmem [#allocation8], %s292
        %s294 = sand.u32 %s17, 1
        %s295 = sand.u32 %s17, 1
        %s296 = smul.addr %s295, 8
        %s297 = scalar_lea.vmem [#allocation9], %s296
        %s298 = sand.u32 %s17, 1
        %s299 = sand.u32 %s17, 1
        %s300 = smul.addr %s299, 8
        %s301 = scalar_lea.vmem [#allocation10], %s300
        %s302 = sand.u32 %s17, 1
        %s303 = sand.u32 %s17, 1
        %s304 = smul.addr %s303, 8
        %s305 = scalar_lea.vmem [#allocation11], %s304
        %s306 = sshrl.u32 %s17, 3
        %s307 = sshrl.u32 %s17, 3
        %s308 = smov [#allocation12]
        %v309 = vld [vmem:[%s249] sm:$0xff]
        %310 = vst [vmem:[%s308] sm:$0xff] %v309
        %s311 = smov [#allocation13]
        %v312 = vld [vmem:[%s253] sm:$0xff]
        %313 = vst [vmem:[%s311] sm:$0xff] %v312
        %s314 = smov [#allocation14]
        %v315 = vld [vmem:[%s257] sm:$0xff]
        %316 = vst [vmem:[%s314] sm:$0xff] %v315
        %s317 = smov [#allocation15]
        %v318 = vld [vmem:[%s261] sm:$0xff]
        %319 = vst [vmem:[%s317] sm:$0xff] %v318
        %320 = vst [vmem:[%s293] sm:$0xff] 0.0
        %321 = vst [vmem:[%s297] sm:$0xff] 0.0
        %322 = vst [vmem:[%s301] sm:$0xff] 0.0
        %323 = vst [vmem:[%s305] sm:$0xff] 0.0
        %s324 = smov %s293
        %v325 = vlaneseq
        %v326 = vand.u32 %v325, 127
        %v327 = vmov %v326
        %v328 = vlaneseq
        %v329 = vshrl.u32 %v328, 7
        %v330 = vmov %v329
        %v331 = vld [vmem:[%s324] sm:$0xff]
        %vm334 = vcmp.eq.s32.totalorder %v330, %v327
        %v335 = vsel %vm334, 1.0, %v331
        %336 = vst [vmem:[%s324] sm:$0xff] %v335
        %s337 = smov %s305
        %v338 = vlaneseq
        %v339 = vand.u32 %v338, 127
        %v340 = vmov %v339
        %v341 = vlaneseq
        %v342 = vshrl.u32 %v341, 7
        %v343 = vmov %v342
        %v344 = vld [vmem:[%s337] sm:$0xff]
        %vm347 = vcmp.eq.s32.totalorder %v343, %v340
        %v348 = vsel %vm347, 1.0, %v344
        %349 = vst [vmem:[%s337] sm:$0xff] %v348
        // While loop
        $region157: #{custom-call.2} parent=155 // loop_pre_header
          _
        $region158: #{custom-call.2} parent=155 // loop_header
          %s351 = sphi 0, %s893
          %v352 = vlaneseq
          %v353 = vand.u32 %v352, 127
          %v354 = vmov %v353
          %v355 = vlaneseq
          %v356 = vshrl.u32 %v355, 7
          %v357 = vmov %v356
          %s358 = smov [#allocation12]
          %v359 = vlaneseq
          %v360 = vand.u32 %v359, 127
          %vm361 = vcmp.ge.s32.totalorder %v360, 0
          %vm362 = vcmp.lt.s32.totalorder %v360, 8
          %vm363 = vmand %vm361, %vm362
          %v364 = vld [vmem:[%s358] sm:$0xff]
          %v365 = vsel %vm363, %v364, 0.0
          %v366 = vmul.f32 %v365, %v365
          %vm369 = vcmp.eq.s32.totalorder %v357, %v354
          %v370 = vsel %vm369, 0.0, %v366
          %v371 = vlaneseq
          %v372 = vand.u32 %v371, 127
          %v373 = vmov %v372
          %v374 = vlaneseq
          %v375 = vshrl.u32 %v374, 7
          %v376 = vmov %v375
          %s377 = smov [#allocation13]
          %v378 = vlaneseq
          %v379 = vand.u32 %v378, 127
          %vm380 = vcmp.ge.s32.totalorder %v379, 0
          %vm381 = vcmp.lt.s32.totalorder %v379, 8
          %vm382 = vmand %vm380, %vm381
          %v383 = vld [vmem:[%s377] sm:$0xff]
          %v384 = vsel %vm382, %v383, 0.0
          %v385 = vmul.f32 %v384, %v384
          %v386 = vadd.f32 %v370, %v385
          %v387 = vadd.f32 %v366, %v385
          %v388 = vlaneseq
          %v389 = vand.u32 %v388, 127
          %v390 = vmov %v389
          %v391 = vlaneseq
          %v392 = vshrl.u32 %v391, 7
          %v393 = vmov %v392
          %s394 = smov [#allocation14]
          %v395 = vlaneseq
          %v396 = vand.u32 %v395, 127
          %vm397 = vcmp.ge.s32.totalorder %v396, 0
          %vm398 = vcmp.lt.s32.totalorder %v396, 8
          %vm399 = vmand %vm397, %vm398
          %v400 = vld [vmem:[%s394] sm:$0xff]
          %v401 = vsel %vm399, %v400, 0.0
          %v402 = vmul.f32 %v401, %v401
          %v403 = vadd.f32 %v386, %v402
          %v404 = vadd.f32 %v387, %v402
          %v405 = vlaneseq
          %v406 = vand.u32 %v405, 127
          %v407 = vmov %v406
          %v408 = vlaneseq
          %v409 = vshrl.u32 %v408, 7
          %v410 = vmov %v409
          %s411 = smov [#allocation15]
          %v412 = vlaneseq
          %v413 = vand.u32 %v412, 127
          %vm414 = vcmp.ge.s32.totalorder %v413, 0
          %vm415 = vcmp.lt.s32.totalorder %v413, 8
          %vm416 = vmand %vm414, %vm415
          %v417 = vld [vmem:[%s411] sm:$0xff]
          %v418 = vsel %vm416, %v417, 0.0
          %v419 = vmul.f32 %v418, %v418
          %vm422 = vcmp.eq.s32.totalorder %v410, %v407
          %v423 = vsel %vm422, 0.0, %v419
          %v424 = vadd.f32 %v403, %v423
          %v425 = vadd.f32 %v404, %v419
          %426 = vadd.xlane.f32.xlu0 %v425
          %v427 = vpop.xlane.xlu0 %426
          %v428 = vrot.slane %v427, 4
          %v429 = vadd.f32 %v427, %v428
          %v430 = vrot.slane %v429, 2
          %v431 = vadd.f32 %v429, %v430
          %v432 = vrot.slane %v431, 1
          %v433 = vadd.f32 %v431, %v432
          %434 = vadd.xlane.f32.xlu0 %v424
          %v435 = vpop.xlane.xlu0 %434
          %v436 = vrot.slane %v435, 4
          %v437 = vadd.f32 %v435, %v436
          %v438 = vrot.slane %v437, 2
          %v439 = vadd.f32 %v437, %v438
          %v440 = vrot.slane %v439, 1
          %v441 = vadd.f32 %v439, %v440
          %s442 = vtos %v441
          %s443 = vtos %v433
          %s444 = smul.f32 1e-10, %s443
          %p445 = scmp.le.f32.partialorder %s442, %s444
          %p446 = scmp.ge.s32.totalorder %s351, 15
          %p447 = por %p445, %p446
        $region159: #{custom-call.2} parent=155 // loop_header_branch
          %895 = sbr.rel (%p447) target = $region163
        $region160: #{custom-call.2} parent=155 // loop_body
          loop: start=0, step=1, limit=15
          $region164: #{custom-call.2} parent=160 // loop_pre_header
            _
          $region165: #{custom-call.2} parent=160 // loop_header
            %s449 = sphi 0, %s453
            %p450 = scmp.ge.s32.totalorder %s449, 15
          $region166: #{custom-call.2} parent=160 // loop_header_branch
            %452 = sbr.rel (%p450) target = $region170
          $region167: #{custom-call.2} parent=160 // loop_body
            #allocation16 [shape = 'f32[1024]{0}', space=vmem, size = 0x1000, scoped, tag = 'a_tl_diag vmem']
            #allocation17 [shape = 'f32[1024]{0}', space=vmem, size = 0x1000, scoped, tag = 'a_tr_diag vmem']
            #allocation18 [shape = 'f32[1024]{0}', space=vmem, size = 0x1000, scoped, tag = 'a_br_diag vmem']
            #allocation19 [shape = 'f32[1024]{0}', space=vmem, size = 0x1000, scoped, tag = 'rt1 vmem']
            #allocation20 [shape = 'f32[1024]{0}', space=vmem, size = 0x1000, scoped, tag = 'rt2 vmem']
            #allocation21 [shape = 'f32[1024]{0}', space=vmem, size = 0x1000, scoped, tag = 'c vmem']
            #allocation22 [shape = 'f32[1024]{0}', space=vmem, size = 0x1000, scoped, tag = 's vmem']
            #allocation23 [shape = 'f32[4096]{0}', space=vmem, size = 0x4000, scoped, tag = 'c broadcast']
            #allocation24 [shape = 'f32[4096]{0}', space=vmem, size = 0x4000, scoped, tag = 's broadcast']
            %s454 = smov [#allocation12]
            %s455 = smov [#allocation16]
            %v456 = vlaneseq
            %v457 = vand.u32 %v456, 127
            %v458 = vmov %v457
            %v459 = vlaneseq
            %v460 = vshrl.u32 %v459, 7
            %v461 = vmov %v460
            %v462 = vld [vmem:[%s454] sm:$0xff]
            %vm465 = vcmp.eq.s32.totalorder %v461, %v458
            %v466 = vsel %vm465, %v462, 0.0
            %v467 = vrot.slane %v466, 4
            %v468 = vadd.f32 %v466, %v467
            %v469 = vrot.slane %v468, 2
            %v470 = vadd.f32 %v468, %v469
            %v471 = vrot.slane %v470, 1
            %v472 = vadd.f32 %v470, %v471
            %473 = vst [vmem:[%s455] sm:$0x1] %v472
            %s474 = smov [#allocation13]
            %s475 = smov [#allocation17]
            %v476 = vlaneseq
            %v477 = vand.u32 %v476, 127
            %v478 = vmov %v477
            %v479 = vlaneseq
            %v480 = vshrl.u32 %v479, 7
            %v481 = vmov %v480
            %v482 = vld [vmem:[%s474] sm:$0xff]
            %vm485 = vcmp.eq.s32.totalorder %v481, %v478
            %v486 = vsel %vm485, %v482, 0.0
            %v487 = vrot.slane %v486, 4
            %v488 = vadd.f32 %v486, %v487
            %v489 = vrot.slane %v488, 2
            %v490 = vadd.f32 %v488, %v489
            %v491 = vrot.slane %v490, 1
            %v492 = vadd.f32 %v490, %v491
            %493 = vst [vmem:[%s475] sm:$0x1] %v492
            %s494 = smov [#allocation15]
            %s495 = smov [#allocation18]
            %v496 = vlaneseq
            %v497 = vand.u32 %v496, 127
            %v498 = vmov %v497
            %v499 = vlaneseq
            %v500 = vshrl.u32 %v499, 7
            %v501 = vmov %v500
            %v502 = vld [vmem:[%s494] sm:$0xff]
            %vm505 = vcmp.eq.s32.totalorder %v501, %v498
            %v506 = vsel %vm505, %v502, 0.0
            %v507 = vrot.slane %v506, 4
            %v508 = vadd.f32 %v506, %v507
            %v509 = vrot.slane %v508, 2
            %v510 = vadd.f32 %v508, %v509
            %v511 = vrot.slane %v510, 1
            %v512 = vadd.f32 %v510, %v511
            %513 = vst [vmem:[%s495] sm:$0x1] %v512
            %s514 = smov [#allocation21]
            %s515 = smov [#allocation22]
            %s516 = smov [#allocation16]
            %v517 = vld [vmem:[%s516] sm:$0xff]
            %s518 = smov [#allocation17]
            %v519 = vld [vmem:[%s518] sm:$0xff]
            %s520 = smov [#allocation18]
            %v521 = vld [vmem:[%s520] sm:$0xff]
            %v522 = vsub.f32 %v521, %v517
            %v523 = vmul.f32 2.0, %v519
            %v524 = vrcp.pop %v523
            %v525 = vmul.f32 %v522, %v524
            %vm526 = vcmp.ge.f32.partialorder %v525, 0.0
            %v527 = vmul.f32 %v525, %v525
            %v528 = vadd.f32 1.0, %v527
            %v529 = vrsqrt.pop %v528
            %v530 = vmul.f32 %v528, %v529
            %vm531 = vcmp.eq.f32.partialorder %v528, inf
            %v532 = vsel %vm531, %v528, %v530
            %vm533 = vcmp.eq.f32.partialorder %v528, 0.0
            %v534 = vand.u32 %v528, 2147483648
            %v535 = vsel %vm533, %v534, %v532
            %v536 = vxor.u32 %v535, 2147483648
            %v537 = vsel %vm526, %v535, %v536
            %v538 = vadd.f32 %v525, %v537
            %v539 = vrcp.pop %v538
            %v540 = vand.u32 2147483647, %v517
            %v541 = vand.u32 2147483647, %v519
            %v542 = vand.u32 2147483647, %v521
            %v543 = vmin.f32 %v540, %v542
            %v544 = vmul.f32 1.1920929e-08, %v543
            %vm545 = vcmp.le.f32.partialorder %v541, %v544
            %v546 = vsel %vm545, 0.0, %v539
            %v547 = vmul.f32 %v546, %v546
            %v548 = vadd.f32 1.0, %v547
            %v549 = vrsqrt.pop %v548
            %v550 = vmul.f32 %v546, %v549
            %v551 = vmul.f32 %v546, %v519
            %v552 = vsub.f32 %v517, %v551
            %v553 = vmul.f32 %v546, %v519
            %v554 = vadd.f32 %v521, %v553
            %s555 = smov [#allocation19]
            %556 = vst [vmem:[%s555] sm:$0xff] %v552
            %s557 = smov [#allocation20]
            %558 = vst [vmem:[%s557] sm:$0xff] %v554
            %s559 = smov %s514
            %560 = vst [vmem:[%s559] sm:$0xff] %v549
            %s561 = smov %s515
            %562 = vst [vmem:[%s561] sm:$0xff] %v550
            %s563 = smov [#allocation21]
            %v564 = vld [vmem:[%s563] ss:$0 sm:$0xff]
            %v565 = vlaneseq
            %v566 = vand.u32 %v565, 127
            %v567 = vmov %v566
            %v568 = vlaneseq
            %v569 = vshrl.u32 %v568, 7
            %v570 = vmov %v569
            %vm572 = vcmp.eq.s32.totalorder %v570, %v567
            %v573 = vsel %vm572, %v564, 0.0
            %574 = vadd.xlane.f32.xlu0 %v573
            %v575 = vpop.xlane.xlu0 %574
            %s576 = smov [#allocation23]
            %577 = vst [vmem:[%s576] sm:$0xff] %v575
            %s578 = smov [#allocation22]
            %v579 = vld [vmem:[%s578] ss:$0 sm:$0xff]
            %v580 = vlaneseq
            %v581 = vand.u32 %v580, 127
            %v582 = vmov %v581
            %v583 = vlaneseq
            %v584 = vshrl.u32 %v583, 7
            %v585 = vmov %v584
            %vm587 = vcmp.eq.s32.totalorder %v585, %v582
            %v588 = vsel %vm587, %v579, 0.0
            %589 = vadd.xlane.f32.xlu0 %v588
            %v590 = vpop.xlane.xlu0 %589
            %s591 = smov [#allocation24]
            %592 = vst [vmem:[%s591] sm:$0xff] %v590
            %s593 = smov [#allocation23]
            %v594 = vld [vmem:[%s593] sm:$0xff]
            %s595 = smov [#allocation24]
            %v596 = vld [vmem:[%s595] sm:$0xff]
            %s597 = smov [#allocation12]
            %s598 = smov [#allocation13]
            %s599 = smov [#allocation14]
            %s600 = smov [#allocation15]
            %v601 = vld [vmem:[%s597] sm:$0xff]
            %v602 = vld [vmem:[%s598] sm:$0xff]
            %v603 = vld [vmem:[%s599] sm:$0xff]
            %v604 = vld [vmem:[%s600] sm:$0xff]
            %v605 = vmul.f32 %v594, %v601
            %v606 = vmul.f32 %v596, %v603
            %v607 = vsub.f32 %v605, %v606
            %v608 = vmul.f32 %v594, %v602
            %v609 = vmul.f32 %v596, %v604
            %v610 = vsub.f32 %v608, %v609
            %v611 = vmul.f32 %v596, %v601
            %v612 = vmul.f32 %v594, %v603
            %v613 = vadd.f32 %v611, %v612
            %v614 = vmul.f32 %v596, %v602
            %v615 = vmul.f32 %v594, %v604
            %v616 = vadd.f32 %v614, %v615
            %617 = vst [vmem:[%s597] sm:$0xff] %v607
            %618 = vst [vmem:[%s598] sm:$0xff] %v610
            %619 = vst [vmem:[%s599] sm:$0xff] %v613
            %620 = vst [vmem:[%s600] sm:$0xff] %v616
            %s621 = smov [#allocation21]
            %v622 = vld [vmem:[%s621] ss:$0 sm:$0xff]
            %s623 = smov [#allocation22]
            %v624 = vld [vmem:[%s623] ss:$0 sm:$0xff]
            %s625 = smov [#allocation12]
            %s626 = smov [#allocation13]
            %s627 = smov [#allocation14]
            %s628 = smov [#allocation15]
            %v629 = vld [vmem:[%s625] sm:$0xff]
            %v630 = vld [vmem:[%s626] sm:$0xff]
            %v631 = vld [vmem:[%s627] sm:$0xff]
            %v632 = vld [vmem:[%s628] sm:$0xff]
            %v633 = vmul.f32 %v622, %v629
            %v634 = vmul.f32 %v624, %v630
            %v635 = vsub.f32 %v633, %v634
            %v636 = vmul.f32 %v624, %v629
            %v637 = vmul.f32 %v622, %v630
            %v638 = vadd.f32 %v636, %v637
            %v639 = vmul.f32 %v622, %v631
            %v640 = vmul.f32 %v624, %v632
            %v641 = vsub.f32 %v639, %v640
            %v642 = vmul.f32 %v624, %v631
            %v643 = vmul.f32 %v622, %v632
            %v644 = vadd.f32 %v642, %v643
            %645 = vst [vmem:[%s625] sm:$0xff] %v635
            %646 = vst [vmem:[%s626] sm:$0xff] %v638
            %647 = vst [vmem:[%s627] sm:$0xff] %v641
            %648 = vst [vmem:[%s628] sm:$0xff] %v644
            %s649 = smov [#allocation12]
            %s650 = smov [#allocation19]
            %v651 = vlaneseq
            %v652 = vand.u32 %v651, 127
            %v653 = vmov %v652
            %v654 = vlaneseq
            %v655 = vshrl.u32 %v654, 7
            %v656 = vmov %v655
            %v657 = vld [vmem:[%s650] ss:$0 sm:$0xff]
            %v658 = vld [vmem:[%s649] sm:$0xff]
            %vm661 = vcmp.eq.s32.totalorder %v656, %v653
            %v662 = vsel %vm661, %v657, %v658
            %663 = vst [vmem:[%s649] sm:$0xff] %v662
            %s664 = smov [#allocation13]
            %v665 = vlaneseq
            %v666 = vand.u32 %v665, 127
            %v667 = vmov %v666
            %v668 = vlaneseq
            %v669 = vshrl.u32 %v668, 7
            %v670 = vmov %v669
            %v671 = vld [vmem:[%s664] sm:$0xff]
            %vm674 = vcmp.eq.s32.totalorder %v670, %v667
            %v675 = vsel %vm674, 0.0, %v671
            %676 = vst [vmem:[%s664] sm:$0xff] %v675
            %s677 = smov [#allocation14]
            %v678 = vlaneseq
            %v679 = vand.u32 %v678, 127
            %v680 = vmov %v679
            %v681 = vlaneseq
            %v682 = vshrl.u32 %v681, 7
            %v683 = vmov %v682
            %v684 = vld [vmem:[%s677] sm:$0xff]
            %vm687 = vcmp.eq.s32.totalorder %v683, %v680
            %v688 = vsel %vm687, 0.0, %v684
            %689 = vst [vmem:[%s677] sm:$0xff] %v688
            %s690 = smov [#allocation15]
            %s691 = smov [#allocation20]
            %v692 = vlaneseq
            %v693 = vand.u32 %v692, 127
            %v694 = vmov %v693
            %v695 = vlaneseq
            %v696 = vshrl.u32 %v695, 7
            %v697 = vmov %v696
            %v698 = vld [vmem:[%s691] ss:$0 sm:$0xff]
            %v699 = vld [vmem:[%s690] sm:$0xff]
            %vm702 = vcmp.eq.s32.totalorder %v697, %v694
            %v703 = vsel %vm702, %v698, %v699
            %704 = vst [vmem:[%s690] sm:$0xff] %v703
            %s705 = smov [#allocation12]
            %s706 = smov [#allocation13]
            %v707 = vld [vmem:[%s706] sm:$0xff]
            %708 = vrot.lane.b32.xlu0 %v707, 1
            %v709 = vpop.permute.xlu0 %708
            %v710 = vld [vmem:[%s705] sm:$0xff]
            %v711 = vld [vmem:[%s705] sm:$0xff]
            %712 = vrot.lane.b32.xlu0 %v711, 1
            %v713 = vpop.permute.xlu0 %712
            %v714 = vlaneseq
            %v715 = vand.u32 %v714, 127
            %vm716 = vcmp.eq.s32.totalorder %v715, 0
            %v717 = vsel %vm716, %v711, %v713
            %v718 = vlaneseq
            %v719 = vand.u32 %v718, 127
            %vm720 = vcmp.eq.s32.totalorder %v719, 1
            %v721 = vsel %vm720, %v709, %v717
            %v722 = vlaneseq
            %v723 = vand.u32 %v722, 127
            %vm724 = vcmp.ge.s32.totalorder %v723, 0
            %vm725 = vcmp.lt.s32.totalorder %v723, 8
            %vm726 = vmand %vm724, %vm725
            %v727 = vsel %vm726, %v721, 0.0
            %v728 = vld [vmem:[%s706] sm:$0xff]
            %729 = vrot.lane.b32.xlu0 %v728, 127
            %v730 = vpop.permute.xlu0 %729
            %v731 = vlaneseq
            %v732 = vand.u32 %v731, 127
            %vm733 = vcmp.eq.s32.totalorder %v732, 7
            %v734 = vsel %vm733, %v710, %v730
            %735 = vst [vmem:[%s705] sm:$0xff] %v727
            %736 = vst [vmem:[%s706] sm:$0xff] %v734
            %s737 = smov [#allocation14]
            %s738 = smov [#allocation15]
            %v739 = vld [vmem:[%s738] sm:$0xff]
            %740 = vrot.lane.b32.xlu0 %v739, 1
            %v741 = vpop.permute.xlu0 %740
            %v742 = vld [vmem:[%s737] sm:$0xff]
            %v743 = vld [vmem:[%s737] sm:$0xff]
            %744 = vrot.lane.b32.xlu0 %v743, 1
            %v745 = vpop.permute.xlu0 %744
            %v746 = vlaneseq
            %v747 = vand.u32 %v746, 127
            %vm748 = vcmp.eq.s32.totalorder %v747, 0
            %v749 = vsel %vm748, %v743, %v745
            %v750 = vlaneseq
            %v751 = vand.u32 %v750, 127
            %vm752 = vcmp.eq.s32.totalorder %v751, 1
            %v753 = vsel %vm752, %v741, %v749
            %v754 = vlaneseq
            %v755 = vand.u32 %v754, 127
            %vm756 = vcmp.ge.s32.totalorder %v755, 0
            %vm757 = vcmp.lt.s32.totalorder %v755, 8
            %vm758 = vmand %vm756, %vm757
            %v759 = vsel %vm758, %v753, 0.0
            %v760 = vld [vmem:[%s738] sm:$0xff]
            %761 = vrot.lane.b32.xlu0 %v760, 127
            %v762 = vpop.permute.xlu0 %761
            %v763 = vlaneseq
            %v764 = vand.u32 %v763, 127
            %vm765 = vcmp.eq.s32.totalorder %v764, 7
            %v766 = vsel %vm765, %v742, %v762
            %767 = vst [vmem:[%s737] sm:$0xff] %v759
            %768 = vst [vmem:[%s738] sm:$0xff] %v766
            %s769 = smov [#allocation12]
            %s770 = smov [#allocation14]
            %v771 = vld [vmem:[%s769] ss:$0 sm:$0xff]
            %s773 = scalar_lea.vmem %s769, 4294967295
            %v774 = vld [vmem:[%s773] sm:$0xfe]
            %v775 = vlaneseq
            %v776 = vshrl.u32 %v775, 7
            %vm777 = vcmp.eq.s32.totalorder %v776, 0
            %v778 = vsel %vm777, %v771, %v774
            %s779 = scalar_lea.vmem %s769, 7
            %v780 = vld [vmem:[%s779] ss:$0 sm:$0xff]
            %781 = vst [vmem:[%s769] sm:$0xff] %v778
            %v782 = vld [vmem:[%s770] ss:$0 sm:$0xff]
            %s783 = scalar_lea.vmem %s769, 1
            %784 = vst [vmem:[%s783] sm:$0x1] %v782
            %s785 = scalar_lea.vmem %s770, 1
            %v786 = vld [vmem:[%s785] sm:$0x7f]
            %v787 = vlaneseq
            %v788 = vshrl.u32 %v787, 7
            %vm789 = vcmp.eq.s32.totalorder %v788, 7
            %v790 = vsel %vm789, %v780, %v786
            %v791 = vld [vmem:[%s770] ss:$0 sm:$0xff]
            %792 = vst [vmem:[%s770] sm:$0xff] %v790
            %s793 = smov [#allocation13]
            %s794 = smov [#allocation15]
            %v795 = vld [vmem:[%s793] ss:$0 sm:$0xff]
            %s797 = scalar_lea.vmem %s793, 4294967295
            %v798 = vld [vmem:[%s797] sm:$0xfe]
            %v799 = vlaneseq
            %v800 = vshrl.u32 %v799, 7
            %vm801 = vcmp.eq.s32.totalorder %v800, 0
            %v802 = vsel %vm801, %v795, %v798
            %s803 = scalar_lea.vmem %s793, 7
            %v804 = vld [vmem:[%s803] ss:$0 sm:$0xff]
            %805 = vst [vmem:[%s793] sm:$0xff] %v802
            %v806 = vld [vmem:[%s794] ss:$0 sm:$0xff]
            %s807 = scalar_lea.vmem %s793, 1
            %808 = vst [vmem:[%s807] sm:$0x1] %v806
            %s809 = scalar_lea.vmem %s794, 1
            %v810 = vld [vmem:[%s809] sm:$0x7f]
            %v811 = vlaneseq
            %v812 = vshrl.u32 %v811, 7
            %vm813 = vcmp.eq.s32.totalorder %v812, 7
            %v814 = vsel %vm813, %v804, %v810
            %v815 = vld [vmem:[%s794] ss:$0 sm:$0xff]
            %816 = vst [vmem:[%s794] sm:$0xff] %v814
            %s817 = smov [#allocation23]
            %v818 = vld [vmem:[%s817] sm:$0xff]
            %s819 = smov [#allocation24]
            %v820 = vld [vmem:[%s819] sm:$0xff]
            %s821 = smov %s293
            %s822 = smov %s297
            %s823 = smov %s301
            %s824 = smov %s305
            %v825 = vld [vmem:[%s821] sm:$0xff]
            %v826 = vld [vmem:[%s822] sm:$0xff]
            %v827 = vld [vmem:[%s823] sm:$0xff]
            %v828 = vld [vmem:[%s824] sm:$0xff]
            %v829 = vmul.f32 %v818, %v825
            %v830 = vmul.f32 %v820, %v827
            %v831 = vsub.f32 %v829, %v830
            %v832 = vmul.f32 %v818, %v826
            %v833 = vmul.f32 %v820, %v828
            %v834 = vsub.f32 %v832, %v833
            %v835 = vmul.f32 %v820, %v825
            %v836 = vmul.f32 %v818, %v827
            %v837 = vadd.f32 %v835, %v836
            %v838 = vmul.f32 %v820, %v826
            %v839 = vmul.f32 %v818, %v828
            %v840 = vadd.f32 %v838, %v839
            %841 = vst [vmem:[%s821] sm:$0xff] %v831
            %842 = vst [vmem:[%s822] sm:$0xff] %v834
            %843 = vst [vmem:[%s823] sm:$0xff] %v837
            %844 = vst [vmem:[%s824] sm:$0xff] %v840
            %s845 = smov %s293
            %s846 = smov %s301
            %v847 = vld [vmem:[%s845] ss:$0 sm:$0xff]
            %s849 = scalar_lea.vmem %s845, 4294967295
            %v850 = vld [vmem:[%s849] sm:$0xfe]
            %v851 = vlaneseq
            %v852 = vshrl.u32 %v851, 7
            %vm853 = vcmp.eq.s32.totalorder %v852, 0
            %v854 = vsel %vm853, %v847, %v850
            %s855 = scalar_lea.vmem %s845, 7
            %v856 = vld [vmem:[%s855] ss:$0 sm:$0xff]
            %857 = vst [vmem:[%s845] sm:$0xff] %v854
            %v858 = vld [vmem:[%s846] ss:$0 sm:$0xff]
            %s859 = scalar_lea.vmem %s845, 1
            %860 = vst [vmem:[%s859] sm:$0x1] %v858
            %s861 = scalar_lea.vmem %s846, 1
            %v862 = vld [vmem:[%s861] sm:$0x7f]
            %v863 = vlaneseq
            %v864 = vshrl.u32 %v863, 7
            %vm865 = vcmp.eq.s32.totalorder %v864, 7
            %v866 = vsel %vm865, %v856, %v862
            %v867 = vld [vmem:[%s846] ss:$0 sm:$0xff]
            %868 = vst [vmem:[%s846] sm:$0xff] %v866
            %s869 = smov %s297
            %s870 = smov %s305
            %v871 = vld [vmem:[%s869] ss:$0 sm:$0xff]
            %s873 = scalar_lea.vmem %s869, 4294967295
            %v874 = vld [vmem:[%s873] sm:$0xfe]
            %v875 = vlaneseq
            %v876 = vshrl.u32 %v875, 7
            %vm877 = vcmp.eq.s32.totalorder %v876, 0
            %v878 = vsel %vm877, %v871, %v874
            %s879 = scalar_lea.vmem %s869, 7
            %v880 = vld [vmem:[%s879] ss:$0 sm:$0xff]
            %881 = vst [vmem:[%s869] sm:$0xff] %v878
            %v882 = vld [vmem:[%s870] ss:$0 sm:$0xff]
            %s883 = scalar_lea.vmem %s869, 1
            %884 = vst [vmem:[%s883] sm:$0x1] %v882
            %s885 = scalar_lea.vmem %s870, 1
            %v886 = vld [vmem:[%s885] sm:$0x7f]
            %v887 = vlaneseq
            %v888 = vshrl.u32 %v887, 7
            %vm889 = vcmp.eq.s32.totalorder %v888, 7
            %v890 = vsel %vm889, %v880, %v886
            %v891 = vld [vmem:[%s870] ss:$0 sm:$0xff]
            %892 = vst [vmem:[%s870] sm:$0xff] %v890
          $region168: #{custom-call.2} parent=160 // loop_footer
            %s453 = sadd.s32 1, %s449
          $region169: #{custom-call.2} parent=160 // loop_footer_branch
            %448 = sbr.rel target = $region165
          $region170: #{custom-call.2} parent=160 // loop_exit
            _
          %s893 = sadd.s32 %s351, 1
        $region161: #{custom-call.2} parent=155 // loop_footer
          _
        $region162: #{custom-call.2} parent=155 // loop_footer_branch
          %350 = sbr.rel target = $region158
        $region163: #{custom-call.2} parent=155 // loop_exit
          _
        %s896 = sand.u32 %s17, 7
        %s897 = scalar_lea.vmem [#allocation4], %s896
        %s898 = sand.u32 %s17, 7
        %s899 = scalar_lea.vmem [#allocation6], %s898
        %s900 = smov [#allocation12]
        %s901 = smov %s897
        %v902 = vlaneseq
        %v903 = vand.u32 %v902, 127
        %v904 = vmov %v903
        %v905 = vlaneseq
        %v906 = vshrl.u32 %v905, 7
        %v907 = vmov %v906
        %v908 = vld [vmem:[%s900] sm:$0xff]
        %vm911 = vcmp.eq.s32.totalorder %v907, %v904
        %v912 = vsel %vm911, %v908, 0.0
        %v913 = vrot.slane %v912, 4
        %v914 = vadd.f32 %v912, %v913
        %v915 = vrot.slane %v914, 2
        %v916 = vadd.f32 %v914, %v915
        %v917 = vrot.slane %v916, 1
        %v918 = vadd.f32 %v916, %v917
        %919 = vst [vmem:[%s901] sm:$0x1] %v918
        %s920 = smov [#allocation15]
        %s921 = smov %s899
        %v922 = vlaneseq
        %v923 = vand.u32 %v922, 127
        %v924 = vmov %v923
        %v925 = vlaneseq
        %v926 = vshrl.u32 %v925, 7
        %v927 = vmov %v926
        %v928 = vld [vmem:[%s920] sm:$0xff]
        %vm931 = vcmp.eq.s32.totalorder %v927, %v924
        %v932 = vsel %vm931, %v928, 0.0
        %v933 = vrot.slane %v932, 4
        %v934 = vadd.f32 %v932, %v933
        %v935 = vrot.slane %v934, 2
        %v936 = vadd.f32 %v934, %v935
        %v937 = vrot.slane %v936, 1
        %v938 = vadd.f32 %v936, %v937
        %939 = vst [vmem:[%s921] sm:$0x1] %v938
        %s941 = sshllo.u32 0, 2
        %v943 = vld [vmem:[#allocation4] sm:%s941]
        %s944 = sshllo.u32 0, 2
        %945 = vst [vmem:[%s283] sm:%s944] %v943
        %s947 = sshllo.u32 0, 2
        %v949 = vld [vmem:[#allocation6] sm:%s947]
        %s950 = sshllo.u32 0, 2
        %951 = vst [vmem:[%s289] sm:%s950] %v949
        %s952 = sand.u32 %s27, 1
        %s953 = sand.u32 %s27, 1
        %s954 = smul.addr %s953, 2
        %s955 = scalar_lea.vmem [#allocation5], %s954
        %s956 = sand.u32 %s55, 1
        %s957 = sand.u32 %s55, 1
        %s958 = smul.addr %s957, 2
        %s959 = scalar_lea.vmem [#allocation7], %s958
        %s960 = sand.u32 %s17, 1
        %s961 = sand.u32 %s17, 1
        %s962 = smul.addr %s961, 8
        %s963 = scalar_lea.vmem [#allocation8], %s962
        %s964 = sand.u32 %s17, 1
        %s965 = sand.u32 %s17, 1
        %s966 = smul.addr %s965, 8
        %s967 = scalar_lea.vmem [#allocation9], %s966
        %s968 = sand.u32 %s17, 1
        %s969 = sand.u32 %s17, 1
        %s970 = smul.addr %s969, 8
        %s971 = scalar_lea.vmem [#allocation10], %s970
        %s972 = sand.u32 %s17, 1
        %s973 = sand.u32 %s17, 1
        %s974 = smul.addr %s973, 8
        %s975 = scalar_lea.vmem [#allocation11], %s974
        // Predicated region
        $region171: #{custom-call.2} parent=155 // pred_check
          %p976 = pneg %p37
        $region172: #{custom-call.2} parent=155 // pred_check_branch
          %978 = sbr.rel (%p976) target = $region174
        $region173: #{custom-call.2} parent=155 // pred_region
          %s979 = sshrl.u32 %s17, 3
          %s980 = smul.addr %s979, 2
          %s981 = scalar_lea.vmem %s4, %s980
          // Predicated region
          $region175: #{custom-call.2} parent=173 // pred_check
            _
          $region176: #{custom-call.2} parent=173 // pred_check_branch
            %983 = sbr.rel (0) target = $region178
          $region177: #{custom-call.2} parent=173 // pred_region
            // Predicated region
            $region179: #{custom-call.2} parent=177 // pred_check
              _
            $region180: #{custom-call.2} parent=177 // pred_check_branch
              %985 = sbr.rel target = $region182
            $region181: #{custom-call.2} parent=177 // pred_region
              // Predicated region
              $region194: #{custom-call.2} parent=181 // pred_check
                _
              $region195: #{custom-call.2} parent=181 // pred_check_branch
                %1000 = sbr.rel (0) target = $region197
              $region196: #{custom-call.2} parent=181 // pred_region
                loop: start=0, step=1, limit=1
                $region198: #{custom-call.2} parent=196 // loop_pre_header
                  _
                $region199: #{custom-call.2} parent=196 // loop_header
                  %s1003 = sphi 0, %s1007
                  %p1004 = scmp.ge.s32.totalorder %s1003, 1
                  %s1008 = sphi %s955, %s955
                  %s1009 = sphi %s981, %s981
                $region200: #{custom-call.2} parent=196 // loop_header_branch
                  %1006 = sbr.rel (%p1004) target = $region204
                $region201: #{custom-call.2} parent=196 // loop_body
                  %v1010 = vld [vmem:[%s1008] sm:$0x3]
                  %1011 = vst [vmem:[%s1009] sm:$0x3] %v1010
                $region202: #{custom-call.2} parent=196 // loop_footer
                  %s1007 = sadd.s32 1, %s1003
                $region203: #{custom-call.2} parent=196 // loop_footer_branch
                  %1002 = sbr.rel target = $region199
                $region204: #{custom-call.2} parent=196 // loop_exit
                  _
              $region197: #{custom-call.2} parent=181 // pred_fallthru
                _
            $region182: #{custom-call.2} parent=177 // pred_fallthru
              _
            // Predicated region
            $region183: #{custom-call.2} parent=177 // pred_check
              _
            $region184: #{custom-call.2} parent=177 // pred_check_branch
              %987 = sbr.rel (0) target = $region186
            $region185: #{custom-call.2} parent=177 // pred_region
              loop: start=0, step=1, limit=1
              $region187: #{custom-call.2} parent=185 // loop_pre_header
                _
              $region188: #{custom-call.2} parent=185 // loop_header
                %s990 = sphi 0, %s994
                %p991 = scmp.ge.s32.totalorder %s990, 1
                %s995 = sphi %s955, %s955
                %s996 = sphi %s981, %s981
              $region189: #{custom-call.2} parent=185 // loop_header_branch
                %993 = sbr.rel (%p991) target = $region193
              $region190: #{custom-call.2} parent=185 // loop_body
                %v997 = vld [vmem:[%s995] sm:$0x3]
                %998 = vst [vmem:[%s996] sm:$0x3] %v997
              $region191: #{custom-call.2} parent=185 // loop_footer
                %s994 = sadd.s32 1, %s990
              $region192: #{custom-call.2} parent=185 // loop_footer_branch
                %989 = sbr.rel target = $region188
              $region193: #{custom-call.2} parent=185 // loop_exit
                _
            $region186: #{custom-call.2} parent=177 // pred_fallthru
              _
          $region178: #{custom-call.2} parent=173 // pred_fallthru
            _
          %1012 = vnop
        $region174: #{custom-call.2} parent=155 // pred_fallthru
          _
        // Predicated region
        $region205: #{custom-call.2} parent=155 // pred_check
          %p1013 = pneg %p65
        $region206: #{custom-call.2} parent=155 // pred_check_branch
          %1015 = sbr.rel (%p1013) target = $region208
        $region207: #{custom-call.2} parent=155 // pred_region
          %s1016 = sshrl.u32 %s17, 3
          %s1017 = smul.addr %s1016, 2
          %s1018 = scalar_lea.vmem %s5, %s1017
          // Predicated region
          $region209: #{custom-call.2} parent=207 // pred_check
            _
          $region210: #{custom-call.2} parent=207 // pred_check_branch
            %1020 = sbr.rel (0) target = $region212
          $region211: #{custom-call.2} parent=207 // pred_region
            // Predicated region
            $region213: #{custom-call.2} parent=211 // pred_check
              _
            $region214: #{custom-call.2} parent=211 // pred_check_branch
              %1022 = sbr.rel target = $region216
            $region215: #{custom-call.2} parent=211 // pred_region
              // Predicated region
              $region228: #{custom-call.2} parent=215 // pred_check
                _
              $region229: #{custom-call.2} parent=215 // pred_check_branch
                %1037 = sbr.rel (0) target = $region231
              $region230: #{custom-call.2} parent=215 // pred_region
                loop: start=0, step=1, limit=1
                $region232: #{custom-call.2} parent=230 // loop_pre_header
                  _
                $region233: #{custom-call.2} parent=230 // loop_header
                  %s1040 = sphi 0, %s1044
                  %p1041 = scmp.ge.s32.totalorder %s1040, 1
                  %s1045 = sphi %s959, %s959
                  %s1046 = sphi %s1018, %s1018
                $region234: #{custom-call.2} parent=230 // loop_header_branch
                  %1043 = sbr.rel (%p1041) target = $region238
                $region235: #{custom-call.2} parent=230 // loop_body
                  %v1047 = vld [vmem:[%s1045] sm:$0x3]
                  %1048 = vst [vmem:[%s1046] sm:$0x3] %v1047
                $region236: #{custom-call.2} parent=230 // loop_footer
                  %s1044 = sadd.s32 1, %s1040
                $region237: #{custom-call.2} parent=230 // loop_footer_branch
                  %1039 = sbr.rel target = $region233
                $region238: #{custom-call.2} parent=230 // loop_exit
                  _
              $region231: #{custom-call.2} parent=215 // pred_fallthru
                _
            $region216: #{custom-call.2} parent=211 // pred_fallthru
              _
            // Predicated region
            $region217: #{custom-call.2} parent=211 // pred_check
              _
            $region218: #{custom-call.2} parent=211 // pred_check_branch
              %1024 = sbr.rel (0) target = $region220
            $region219: #{custom-call.2} parent=211 // pred_region
              loop: start=0, step=1, limit=1
              $region221: #{custom-call.2} parent=219 // loop_pre_header
                _
              $region222: #{custom-call.2} parent=219 // loop_header
                %s1027 = sphi 0, %s1031
                %p1028 = scmp.ge.s32.totalorder %s1027, 1
                %s1032 = sphi %s959, %s959
                %s1033 = sphi %s1018, %s1018
              $region223: #{custom-call.2} parent=219 // loop_header_branch
                %1030 = sbr.rel (%p1028) target = $region227
              $region224: #{custom-call.2} parent=219 // loop_body
                %v1034 = vld [vmem:[%s1032] sm:$0x3]
                %1035 = vst [vmem:[%s1033] sm:$0x3] %v1034
              $region225: #{custom-call.2} parent=219 // loop_footer
                %s1031 = sadd.s32 1, %s1027
              $region226: #{custom-call.2} parent=219 // loop_footer_branch
                %1026 = sbr.rel target = $region222
              $region227: #{custom-call.2} parent=219 // loop_exit
                _
            $region220: #{custom-call.2} parent=211 // pred_fallthru
              _
          $region212: #{custom-call.2} parent=207 // pred_fallthru
            _
          %1049 = vnop
        $region208: #{custom-call.2} parent=155 // pred_fallthru
          _
        %s1050 = smul.addr %s17, 8
        %s1051 = scalar_lea.vmem %s6, %s1050
        // Predicated region
        $region239: #{custom-call.2} parent=155 // pred_check
          _
        $region240: #{custom-call.2} parent=155 // pred_check_branch
          %1053 = sbr.rel (0) target = $region242
        $region241: #{custom-call.2} parent=155 // pred_region
          // Predicated region
          $region243: #{custom-call.2} parent=241 // pred_check
            _
          $region244: #{custom-call.2} parent=241 // pred_check_branch
            %1055 = sbr.rel (0) target = $region246
          $region245: #{custom-call.2} parent=241 // pred_region
            // Predicated region
            $region258: #{custom-call.2} parent=245 // pred_check
              _
            $region259: #{custom-call.2} parent=245 // pred_check_branch
              %1070 = sbr.rel (0) target = $region261
            $region260: #{custom-call.2} parent=245 // pred_region
              loop: start=0, step=1, limit=1
              $region262: #{custom-call.2} parent=260 // loop_pre_header
                _
              $region263: #{custom-call.2} parent=260 // loop_header
                %s1072 = sphi 0, %s1076
                %p1073 = scmp.ge.s32.totalorder %s1072, 1
                %s1077 = sphi %s963, %s963
                %s1078 = sphi %s1051, %s1051
              $region264: #{custom-call.2} parent=260 // loop_header_branch
                %1075 = sbr.rel (%p1073) target = $region268
              $region265: #{custom-call.2} parent=260 // loop_body
                %v1079 = vld [vmem:[%s1077] sm:$0xff]
                %1080 = vst [vmem:[%s1078] sm:$0xff] %v1079
              $region266: #{custom-call.2} parent=260 // loop_footer
                %s1076 = sadd.s32 1, %s1072
              $region267: #{custom-call.2} parent=260 // loop_footer_branch
                %1071 = sbr.rel target = $region263
              $region268: #{custom-call.2} parent=260 // loop_exit
                _
            $region261: #{custom-call.2} parent=245 // pred_fallthru
              _
            // Predicated region
            $region269: #{custom-call.2} parent=245 // pred_check
              _
            $region270: #{custom-call.2} parent=245 // pred_check_branch
              %1082 = sbr.rel target = $region272
            $region271: #{custom-call.2} parent=245 // pred_region
              _
            $region272: #{custom-call.2} parent=245 // pred_fallthru
              _
          $region246: #{custom-call.2} parent=241 // pred_fallthru
            _
          // Predicated region
          $region247: #{custom-call.2} parent=241 // pred_check
            _
          $region248: #{custom-call.2} parent=241 // pred_check_branch
            %1057 = sbr.rel target = $region250
          $region249: #{custom-call.2} parent=241 // pred_region
            loop: start=0, step=1, limit=1
            $region251: #{custom-call.2} parent=249 // loop_pre_header
              _
            $region252: #{custom-call.2} parent=249 // loop_header
              %s1060 = sphi 0, %s1064
              %p1061 = scmp.ge.s32.totalorder %s1060, 1
              %s1065 = sphi %s963, %s963
              %s1066 = sphi %s1051, %s1051
            $region253: #{custom-call.2} parent=249 // loop_header_branch
              %1063 = sbr.rel (%p1061) target = $region257
            $region254: #{custom-call.2} parent=249 // loop_body
              %v1067 = vld [vmem:[%s1065] sm:$0xff]
              %1068 = vst [vmem:[%s1066] sm:$0xff] %v1067
            $region255: #{custom-call.2} parent=249 // loop_footer
              %s1064 = sadd.s32 1, %s1060
            $region256: #{custom-call.2} parent=249 // loop_footer_branch
              %1059 = sbr.rel target = $region252
            $region257: #{custom-call.2} parent=249 // loop_exit
              _
          $region250: #{custom-call.2} parent=241 // pred_fallthru
            _
        $region242: #{custom-call.2} parent=155 // pred_fallthru
          _
        %1083 = vnop
        %s1084 = smul.addr %s17, 8
        %s1085 = scalar_lea.vmem %s7, %s1084
        // Predicated region
        $region273: #{custom-call.2} parent=155 // pred_check
          _
        $region274: #{custom-call.2} parent=155 // pred_check_branch
          %1087 = sbr.rel (0) target = $region276
        $region275: #{custom-call.2} parent=155 // pred_region
          // Predicated region
          $region277: #{custom-call.2} parent=275 // pred_check
            _
          $region278: #{custom-call.2} parent=275 // pred_check_branch
            %1089 = sbr.rel (0) target = $region280
          $region279: #{custom-call.2} parent=275 // pred_region
            // Predicated region
            $region292: #{custom-call.2} parent=279 // pred_check
              _
            $region293: #{custom-call.2} parent=279 // pred_check_branch
              %1104 = sbr.rel (0) target = $region295
            $region294: #{custom-call.2} parent=279 // pred_region
              loop: start=0, step=1, limit=1
              $region296: #{custom-call.2} parent=294 // loop_pre_header
                _
              $region297: #{custom-call.2} parent=294 // loop_header
                %s1106 = sphi 0, %s1110
                %p1107 = scmp.ge.s32.totalorder %s1106, 1
                %s1111 = sphi %s967, %s967
                %s1112 = sphi %s1085, %s1085
              $region298: #{custom-call.2} parent=294 // loop_header_branch
                %1109 = sbr.rel (%p1107) target = $region302
              $region299: #{custom-call.2} parent=294 // loop_body
                %v1113 = vld [vmem:[%s1111] sm:$0xff]
                %1114 = vst [vmem:[%s1112] sm:$0xff] %v1113
              $region300: #{custom-call.2} parent=294 // loop_footer
                %s1110 = sadd.s32 1, %s1106
              $region301: #{custom-call.2} parent=294 // loop_footer_branch
                %1105 = sbr.rel target = $region297
              $region302: #{custom-call.2} parent=294 // loop_exit
                _
            $region295: #{custom-call.2} parent=279 // pred_fallthru
              _
            // Predicated region
            $region303: #{custom-call.2} parent=279 // pred_check
              _
            $region304: #{custom-call.2} parent=279 // pred_check_branch
              %1116 = sbr.rel target = $region306
            $region305: #{custom-call.2} parent=279 // pred_region
              _
            $region306: #{custom-call.2} parent=279 // pred_fallthru
              _
          $region280: #{custom-call.2} parent=275 // pred_fallthru
            _
          // Predicated region
          $region281: #{custom-call.2} parent=275 // pred_check
            _
          $region282: #{custom-call.2} parent=275 // pred_check_branch
            %1091 = sbr.rel target = $region284
          $region283: #{custom-call.2} parent=275 // pred_region
            loop: start=0, step=1, limit=1
            $region285: #{custom-call.2} parent=283 // loop_pre_header
              _
            $region286: #{custom-call.2} parent=283 // loop_header
              %s1094 = sphi 0, %s1098
              %p1095 = scmp.ge.s32.totalorder %s1094, 1
              %s1099 = sphi %s967, %s967
              %s1100 = sphi %s1085, %s1085
            $region287: #{custom-call.2} parent=283 // loop_header_branch
              %1097 = sbr.rel (%p1095) target = $region291
            $region288: #{custom-call.2} parent=283 // loop_body
              %v1101 = vld [vmem:[%s1099] sm:$0xff]
              %1102 = vst [vmem:[%s1100] sm:$0xff] %v1101
            $region289: #{custom-call.2} parent=283 // loop_footer
              %s1098 = sadd.s32 1, %s1094
            $region290: #{custom-call.2} parent=283 // loop_footer_branch
              %1093 = sbr.rel target = $region286
            $region291: #{custom-call.2} parent=283 // loop_exit
              _
          $region284: #{custom-call.2} parent=275 // pred_fallthru
            _
        $region276: #{custom-call.2} parent=155 // pred_fallthru
          _
        %1117 = vnop
        %s1118 = smul.addr %s17, 8
        %s1119 = scalar_lea.vmem %s8, %s1118
        // Predicated region
        $region307: #{custom-call.2} parent=155 // pred_check
          _
        $region308: #{custom-call.2} parent=155 // pred_check_branch
          %1121 = sbr.rel (0) target = $region310
        $region309: #{custom-call.2} parent=155 // pred_region
          // Predicated region
          $region311: #{custom-call.2} parent=309 // pred_check
            _
          $region312: #{custom-call.2} parent=309 // pred_check_branch
            %1123 = sbr.rel (0) target = $region314
          $region313: #{custom-call.2} parent=309 // pred_region
            // Predicated region
            $region326: #{custom-call.2} parent=313 // pred_check
              _
            $region327: #{custom-call.2} parent=313 // pred_check_branch
              %1138 = sbr.rel (0) target = $region329
            $region328: #{custom-call.2} parent=313 // pred_region
              loop: start=0, step=1, limit=1
              $region330: #{custom-call.2} parent=328 // loop_pre_header
                _
              $region331: #{custom-call.2} parent=328 // loop_header
                %s1140 = sphi 0, %s1144
                %p1141 = scmp.ge.s32.totalorder %s1140, 1
                %s1145 = sphi %s971, %s971
                %s1146 = sphi %s1119, %s1119
              $region332: #{custom-call.2} parent=328 // loop_header_branch
                %1143 = sbr.rel (%p1141) target = $region336
              $region333: #{custom-call.2} parent=328 // loop_body
                %v1147 = vld [vmem:[%s1145] sm:$0xff]
                %1148 = vst [vmem:[%s1146] sm:$0xff] %v1147
              $region334: #{custom-call.2} parent=328 // loop_footer
                %s1144 = sadd.s32 1, %s1140
              $region335: #{custom-call.2} parent=328 // loop_footer_branch
                %1139 = sbr.rel target = $region331
              $region336: #{custom-call.2} parent=328 // loop_exit
                _
            $region329: #{custom-call.2} parent=313 // pred_fallthru
              _
            // Predicated region
            $region337: #{custom-call.2} parent=313 // pred_check
              _
            $region338: #{custom-call.2} parent=313 // pred_check_branch
              %1150 = sbr.rel target = $region340
            $region339: #{custom-call.2} parent=313 // pred_region
              _
            $region340: #{custom-call.2} parent=313 // pred_fallthru
              _
          $region314: #{custom-call.2} parent=309 // pred_fallthru
            _
          // Predicated region
          $region315: #{custom-call.2} parent=309 // pred_check
            _
          $region316: #{custom-call.2} parent=309 // pred_check_branch
            %1125 = sbr.rel target = $region318
          $region317: #{custom-call.2} parent=309 // pred_region
            loop: start=0, step=1, limit=1
            $region319: #{custom-call.2} parent=317 // loop_pre_header
              _
            $region320: #{custom-call.2} parent=317 // loop_header
              %s1128 = sphi 0, %s1132
              %p1129 = scmp.ge.s32.totalorder %s1128, 1
              %s1133 = sphi %s971, %s971
              %s1134 = sphi %s1119, %s1119
            $region321: #{custom-call.2} parent=317 // loop_header_branch
              %1131 = sbr.rel (%p1129) target = $region325
            $region322: #{custom-call.2} parent=317 // loop_body
              %v1135 = vld [vmem:[%s1133] sm:$0xff]
              %1136 = vst [vmem:[%s1134] sm:$0xff] %v1135
            $region323: #{custom-call.2} parent=317 // loop_footer
              %s1132 = sadd.s32 1, %s1128
            $region324: #{custom-call.2} parent=317 // loop_footer_branch
              %1127 = sbr.rel target = $region320
            $region325: #{custom-call.2} parent=317 // loop_exit
              _
          $region318: #{custom-call.2} parent=309 // pred_fallthru
            _
        $region310: #{custom-call.2} parent=155 // pred_fallthru
          _
        %1151 = vnop
        %s1152 = smul.addr %s17, 8
        %s1153 = scalar_lea.vmem %s9, %s1152
        // Predicated region
        $region341: #{custom-call.2} parent=155 // pred_check
          _
        $region342: #{custom-call.2} parent=155 // pred_check_branch
          %1155 = sbr.rel (0) target = $region344
        $region343: #{custom-call.2} parent=155 // pred_region
          // Predicated region
          $region345: #{custom-call.2} parent=343 // pred_check
            _
          $region346: #{custom-call.2} parent=343 // pred_check_branch
            %1157 = sbr.rel (0) target = $region348
          $region347: #{custom-call.2} parent=343 // pred_region
            // Predicated region
            $region360: #{custom-call.2} parent=347 // pred_check
              _
            $region361: #{custom-call.2} parent=347 // pred_check_branch
              %1172 = sbr.rel (0) target = $region363
            $region362: #{custom-call.2} parent=347 // pred_region
              loop: start=0, step=1, limit=1
              $region364: #{custom-call.2} parent=362 // loop_pre_header
                _
              $region365: #{custom-call.2} parent=362 // loop_header
                %s1174 = sphi 0, %s1178
                %p1175 = scmp.ge.s32.totalorder %s1174, 1
                %s1179 = sphi %s975, %s975
                %s1180 = sphi %s1153, %s1153
              $region366: #{custom-call.2} parent=362 // loop_header_branch
                %1177 = sbr.rel (%p1175) target = $region370
              $region367: #{custom-call.2} parent=362 // loop_body
                %v1181 = vld [vmem:[%s1179] sm:$0xff]
                %1182 = vst [vmem:[%s1180] sm:$0xff] %v1181
              $region368: #{custom-call.2} parent=362 // loop_footer
                %s1178 = sadd.s32 1, %s1174
              $region369: #{custom-call.2} parent=362 // loop_footer_branch
                %1173 = sbr.rel target = $region365
              $region370: #{custom-call.2} parent=362 // loop_exit
                _
            $region363: #{custom-call.2} parent=347 // pred_fallthru
              _
            // Predicated region
            $region371: #{custom-call.2} parent=347 // pred_check
              _
            $region372: #{custom-call.2} parent=347 // pred_check_branch
              %1184 = sbr.rel target = $region374
            $region373: #{custom-call.2} parent=347 // pred_region
              _
            $region374: #{custom-call.2} parent=347 // pred_fallthru
              _
          $region348: #{custom-call.2} parent=343 // pred_fallthru
            _
          // Predicated region
          $region349: #{custom-call.2} parent=343 // pred_check
            _
          $region350: #{custom-call.2} parent=343 // pred_check_branch
            %1159 = sbr.rel target = $region352
          $region351: #{custom-call.2} parent=343 // pred_region
            loop: start=0, step=1, limit=1
            $region353: #{custom-call.2} parent=351 // loop_pre_header
              _
            $region354: #{custom-call.2} parent=351 // loop_header
              %s1162 = sphi 0, %s1166
              %p1163 = scmp.ge.s32.totalorder %s1162, 1
              %s1167 = sphi %s975, %s975
              %s1168 = sphi %s1153, %s1153
            $region355: #{custom-call.2} parent=351 // loop_header_branch
              %1165 = sbr.rel (%p1163) target = $region359
            $region356: #{custom-call.2} parent=351 // loop_body
              %v1169 = vld [vmem:[%s1167] sm:$0xff]
              %1170 = vst [vmem:[%s1168] sm:$0xff] %v1169
            $region357: #{custom-call.2} parent=351 // loop_footer
              %s1166 = sadd.s32 1, %s1162
            $region358: #{custom-call.2} parent=351 // loop_footer_branch
              %1161 = sbr.rel target = $region354
            $region359: #{custom-call.2} parent=351 // loop_exit
              _
          $region352: #{custom-call.2} parent=343 // pred_fallthru
            _
        $region344: #{custom-call.2} parent=155 // pred_fallthru
          _
        %1185 = vnop
      $region156: #{custom-call.2} parent=5 // pred_fallthru
        _
      %p1186 = scmp.le.s32.totalorder 2, %s12
      // Predicated region
      $region375: #{custom-call.2} parent=5 // pred_check
        %p1187 = pneg %p1186
      $region376: #{custom-call.2} parent=5 // pred_check_branch
        %1189 = sbr.rel (%p1187) target = $region378
      $region377: #{custom-call.2} parent=5 // pred_region
        %s1190 = ssub.s32 %s12, 2
        // Predicated region
        $region379: #{custom-call.2} parent=377 // pred_check
          %p1191 = pneg %p43
        $region380: #{custom-call.2} parent=377 // pred_check_branch
          %1193 = sbr.rel (%p1191) target = $region382
        $region381: #{custom-call.2} parent=377 // pred_region
          %s1194 = sand.u32 %s28, 1
          %s1195 = sand.u32 %s28, 1
          %s1196 = smul.addr %s1195, 2
          %s1197 = scalar_lea.vmem [#allocation5], %s1196
        $region382: #{custom-call.2} parent=377 // pred_fallthru
          _
        // Predicated region
        $region383: #{custom-call.2} parent=377 // pred_check
          %p1198 = pneg %p71
        $region384: #{custom-call.2} parent=377 // pred_check_branch
          %1200 = sbr.rel (%p1198) target = $region386
        $region385: #{custom-call.2} parent=377 // pred_region
          %s1201 = sand.u32 %s56, 1
          %s1202 = sand.u32 %s56, 1
          %s1203 = smul.addr %s1202, 2
          %s1204 = scalar_lea.vmem [#allocation7], %s1203
        $region386: #{custom-call.2} parent=377 // pred_fallthru
          _
        %s1205 = sand.u32 %s18, 1
        %s1206 = sand.u32 %s18, 1
        %s1207 = smul.addr %s1206, 8
        %s1208 = scalar_lea.vmem [#allocation8], %s1207
        %s1209 = sand.u32 %s18, 1
        %s1210 = sand.u32 %s18, 1
        %s1211 = smul.addr %s1210, 8
        %s1212 = scalar_lea.vmem [#allocation9], %s1211
        %s1213 = sand.u32 %s18, 1
        %s1214 = sand.u32 %s18, 1
        %s1215 = smul.addr %s1214, 8
        %s1216 = scalar_lea.vmem [#allocation10], %s1215
        %s1217 = sand.u32 %s18, 1
        %s1218 = sand.u32 %s18, 1
        %s1219 = smul.addr %s1218, 8
        %s1220 = scalar_lea.vmem [#allocation11], %s1219
      $region378: #{custom-call.2} parent=5 // pred_fallthru
        _
    $region6: #{custom-call.2} parent=1 // loop_footer
      %s16 = sadd.s32 1, %s12
    $region7: #{custom-call.2} parent=1 // loop_footer_branch
      %11 = sbr.rel target = $region3
    $region8: #{custom-call.2} parent=1 // loop_exit
      _

// kernel: gsr_layer_batched.1
$region0: #{gsr_layer_batched.1}
  #allocation0 [shape = 'u32[]', space=smem, size = 0x4, offset = 0x4, fixed_abs, tag = 'smem constant byte address 0x4 - core index']
  #allocation1 [shape = 'u32[144,128]{1,0:T(1,128)}', space=vmem, size = 0x12000, scoped, tag = 'internal scratch']
  %s0 = inlined_call_operand.vmem [shape: f32[128,128], index: 0, kind: input, shape index: {}]
  %s1 = inlined_call_operand.vmem [shape: f32[128,128], index: 1, kind: input, shape index: {}]
  %s2 = inlined_call_operand.vmem [shape: f32[2,128,128], index: 2, kind: input, shape index: {}]
  %s3 = inlined_call_operand.vmem [shape: f32[2,128,128], index: 3, kind: input, shape index: {}]
  %s4 = inlined_call_operand.vmem [shape: f32[2,128,128], index: 4, kind: output, shape index: {0}]
  %s5 = inlined_call_operand.vmem [shape: f32[2,128,128], index: 5, kind: output, shape index: {1}]
  %6 = xla_tuple %s4, %s5
  %s7 = sld [smem:[#allocation0]]
  $region57: #{gsr_layer_batched.1} parent=0
    _
  %s9 = ssub.s32 1, %s7
  %s10 = scalar_select 0, %s9, %s7
  loop: start=0, step=1, limit=4
  $region2: #{gsr_layer_batched.1} parent=0 // loop_pre_header
    _
  $region3: #{gsr_layer_batched.1} parent=0 // loop_header
    %s12 = sphi 0, %s16
    %p13 = scmp.ge.s32.totalorder %s12, 4
    %s20 = sphi 0, %s20
    %s22 = sphi 0, %s20
    %s23 = sphi 0, %s22
    %s37 = sphi 0, %s23
    %s41 = sphi 0, %s41
    %s43 = sphi 0, %s41
    %s44 = sphi 0, %s43
    %s58 = sphi 0, %s44
    %s64 = sphi 0, %s66
    %s67 = sphi 0, %s64
    %s68 = sphi 0, %s67
    %s84 = sphi 0, %s68
    %s90 = sphi 0, %s92
    %s93 = sphi 0, %s90
    %s94 = sphi 0, %s93
    %s110 = sphi 0, %s94
    %s116 = sphi 0, %s118
    %s119 = sphi 0, %s116
    %s120 = sphi 0, %s119
    %s136 = sphi 0, %s120
    %s142 = sphi 0, %s144
    %s145 = sphi 0, %s142
    %s146 = sphi 0, %s145
    %s162 = sphi 0, %s146
  $region4: #{gsr_layer_batched.1} parent=0 // loop_header_branch
    %15 = sbr.rel (%p13) target = $region8
  $region5: #{gsr_layer_batched.1} parent=0 // loop_body
    %s17 = ssub.s32 %s12, 1
    %s18 = ssub.s32 %s12, 2
    %s19 = sadd.s32 %s12, 1
    %s21 = sadd.s32 %s20, 1
    %p24 = scmp.eq.s32.totalorder %s12, 1
    %p25 = scmp.ne.s32.totalorder %s20, %s22
    %p26 = scmp.eq.s32.totalorder %s12, 0
    %p27 = por %p25, %p26
    %p28 = scmp.ne.s32.totalorder %s20, %s22
    %p29 = scmp.eq.s32.totalorder %s17, 1
    %p30 = por %p28, %p29
    %p31 = scmp.ne.s32.totalorder %s22, %s23
    %p32 = scmp.eq.s32.totalorder %s17, 0
    %p33 = por %p31, %p32
    %p34 = scmp.ne.s32.totalorder %s22, %s23
    %p35 = scmp.eq.s32.totalorder %s18, 1
    %p36 = por %p34, %p35
    %p38 = scmp.ne.s32.totalorder %s23, %s37
    %p39 = scmp.eq.s32.totalorder %s18, 0
    %p40 = por %p38, %p39
    %s42 = sadd.s32 %s41, 1
    %p45 = scmp.eq.s32.totalorder %s12, 1
    %p46 = scmp.ne.s32.totalorder %s41, %s43
    %p47 = scmp.eq.s32.totalorder %s12, 0
    %p48 = por %p46, %p47
    %p49 = scmp.ne.s32.totalorder %s41, %s43
    %p50 = scmp.eq.s32.totalorder %s17, 1
    %p51 = por %p49, %p50
    %p52 = scmp.ne.s32.totalorder %s43, %s44
    %p53 = scmp.eq.s32.totalorder %s17, 0
    %p54 = por %p52, %p53
    %p55 = scmp.ne.s32.totalorder %s43, %s44
    %p56 = scmp.eq.s32.totalorder %s18, 1
    %p57 = por %p55, %p56
    %p59 = scmp.ne.s32.totalorder %s44, %s58
    %p60 = scmp.eq.s32.totalorder %s18, 0
    %p61 = por %p59, %p60
    %s62 = ssub.s32 %s12, %s19
    %p63 = scmp.eq.s32.totalorder %s62, 0
    %s65 = sadd.s32 %s64, 1
    %s66 = scalar_select %p63, %s64, %s65
    %p69 = pneg %p63
    %p70 = scmp.eq.s32.totalorder %s12, 1
    %p71 = por %p69, %p70
    %p72 = scmp.ne.s32.totalorder %s64, %s67
    %p73 = scmp.eq.s32.totalorder %s12, 0
    %p74 = por %p72, %p73
    %p75 = scmp.ne.s32.totalorder %s64, %s67
    %p76 = scmp.eq.s32.totalorder %s17, 1
    %p77 = por %p75, %p76
    %p78 = scmp.ne.s32.totalorder %s67, %s68
    %p79 = scmp.eq.s32.totalorder %s17, 0
    %p80 = por %p78, %p79
    %p81 = scmp.ne.s32.totalorder %s67, %s68
    %p82 = scmp.eq.s32.totalorder %s18, 1
    %p83 = por %p81, %p82
    %p85 = scmp.ne.s32.totalorder %s68, %s84
    %p86 = scmp.eq.s32.totalorder %s18, 0
    %p87 = por %p85, %p86
    %s88 = ssub.s32 %s12, %s19
    %p89 = scmp.eq.s32.totalorder %s88, 0
    %s91 = sadd.s32 %s90, 1
    %s92 = scalar_select %p89, %s90, %s91
    %p95 = pneg %p89
    %p96 = scmp.eq.s32.totalorder %s12, 1
    %p97 = por %p95, %p96
    %p98 = scmp.ne.s32.totalorder %s90, %s93
    %p99 = scmp.eq.s32.totalorder %s12, 0
    %p100 = por %p98, %p99
    %p101 = scmp.ne.s32.totalorder %s90, %s93
    %p102 = scmp.eq.s32.totalorder %s17, 1
    %p103 = por %p101, %p102
    %p104 = scmp.ne.s32.totalorder %s93, %s94
    %p105 = scmp.eq.s32.totalorder %s17, 0
    %p106 = por %p104, %p105
    %p107 = scmp.ne.s32.totalorder %s93, %s94
    %p108 = scmp.eq.s32.totalorder %s18, 1
    %p109 = por %p107, %p108
    %p111 = scmp.ne.s32.totalorder %s94, %s110
    %p112 = scmp.eq.s32.totalorder %s18, 0
    %p113 = por %p111, %p112
    %s114 = ssub.s32 %s12, %s19
    %p115 = scmp.eq.s32.totalorder %s114, 0
    %s117 = sadd.s32 %s116, 1
    %s118 = scalar_select %p115, %s116, %s117
    %p121 = pneg %p115
    %p122 = scmp.eq.s32.totalorder %s12, 1
    %p123 = por %p121, %p122
    %p124 = scmp.ne.s32.totalorder %s116, %s119
    %p125 = scmp.eq.s32.totalorder %s12, 0
    %p126 = por %p124, %p125
    %p127 = scmp.ne.s32.totalorder %s116, %s119
    %p128 = scmp.eq.s32.totalorder %s17, 1
    %p129 = por %p127, %p128
    %p130 = scmp.ne.s32.totalorder %s119, %s120
    %p131 = scmp.eq.s32.totalorder %s17, 0
    %p132 = por %p130, %p131
    %p133 = scmp.ne.s32.totalorder %s119, %s120
    %p134 = scmp.eq.s32.totalorder %s18, 1
    %p135 = por %p133, %p134
    %p137 = scmp.ne.s32.totalorder %s120, %s136
    %p138 = scmp.eq.s32.totalorder %s18, 0
    %p139 = por %p137, %p138
    %s140 = ssub.s32 %s12, %s19
    %p141 = scmp.eq.s32.totalorder %s140, 0
    %s143 = sadd.s32 %s142, 1
    %s144 = scalar_select %p141, %s142, %s143
    %p147 = pneg %p141
    %p148 = scmp.eq.s32.totalorder %s12, 1
    %p149 = por %p147, %p148
    %p150 = scmp.ne.s32.totalorder %s142, %s145
    %p151 = scmp.eq.s32.totalorder %s12, 0
    %p152 = por %p150, %p151
    %p153 = scmp.ne.s32.totalorder %s142, %s145
    %p154 = scmp.eq.s32.totalorder %s17, 1
    %p155 = por %p153, %p154
    %p156 = scmp.ne.s32.totalorder %s145, %s146
    %p157 = scmp.eq.s32.totalorder %s17, 0
    %p158 = por %p156, %p157
    %p159 = scmp.ne.s32.totalorder %s145, %s146
    %p160 = scmp.eq.s32.totalorder %s18, 1
    %p161 = por %p159, %p160
    %p163 = scmp.ne.s32.totalorder %s146, %s162
    %p164 = scmp.eq.s32.totalorder %s18, 0
    %p165 = por %p163, %p164
    %p166 = scmp.le.s32.totalorder 1, %s12
    %p167 = scmp.lt.s32.totalorder %s12, 3
    %p168 = pnand %p166, %p167
    %p169 = pneg %p168
    // Predicated region
    $region9: #{gsr_layer_batched.1} parent=5 // pred_check
      _
    $region10: #{gsr_layer_batched.1} parent=5 // pred_check_branch
      %171 = sbr.rel (%p168) target = $region12
    $region11: #{gsr_layer_batched.1} parent=5 // pred_region
      %s172 = ssub.s32 %s12, 1
      // Predicated region
      $region13: #{gsr_layer_batched.1} parent=11 // pred_check
        %p173 = pneg %p33
      $region14: #{gsr_layer_batched.1} parent=11 // pred_check_branch
        %175 = sbr.rel (%p173) target = $region16
      $region15: #{gsr_layer_batched.1} parent=11 // pred_region
        _
      $region16: #{gsr_layer_batched.1} parent=11 // pred_fallthru
        _
      // Predicated region
      $region17: #{gsr_layer_batched.1} parent=11 // pred_check
        %p176 = pneg %p54
      $region18: #{gsr_layer_batched.1} parent=11 // pred_check_branch
        %178 = sbr.rel (%p176) target = $region20
      $region19: #{gsr_layer_batched.1} parent=11 // pred_region
        _
      $region20: #{gsr_layer_batched.1} parent=11 // pred_fallthru
        _
    $region12: #{gsr_layer_batched.1} parent=5 // pred_fallthru
      _
    %p179 = scmp.lt.s32.totalorder %s12, 2
    // Predicated region
    $region21: #{gsr_layer_batched.1} parent=5 // pred_check
      %p180 = pneg %p179
    $region22: #{gsr_layer_batched.1} parent=5 // pred_check_branch
      %182 = sbr.rel (%p180) target = $region24
    $region23: #{gsr_layer_batched.1} parent=5 // pred_region
      // Predicated region
      $region25: #{gsr_layer_batched.1} parent=23 // pred_check
        %p183 = pneg %p74
      $region26: #{gsr_layer_batched.1} parent=23 // pred_check_branch
        %185 = sbr.rel (%p183) target = $region28
      $region27: #{gsr_layer_batched.1} parent=23 // pred_region
        %p186 = scmp.lt.s32.totalorder %s12, 1
        %s187 = scalar_select %p186, %s12, 1
        %s188 = smul.addr %s187, 16
        %s189 = smul.addr %s188, 8
        %s190 = scalar_lea.vmem %s2, %s189
      $region28: #{gsr_layer_batched.1} parent=23 // pred_fallthru
        _
      // Predicated region
      $region29: #{gsr_layer_batched.1} parent=23 // pred_check
        %p191 = pneg %p100
      $region30: #{gsr_layer_batched.1} parent=23 // pred_check_branch
        %193 = sbr.rel (%p191) target = $region32
      $region31: #{gsr_layer_batched.1} parent=23 // pred_region
        %p194 = scmp.lt.s32.totalorder %s12, 1
        %s195 = scalar_select %p194, %s12, 1
        %s196 = smul.addr %s195, 16
        %s197 = smul.addr %s196, 8
        %s198 = scalar_lea.vmem %s3, %s197
      $region32: #{gsr_layer_batched.1} parent=23 // pred_fallthru
        _
    $region24: #{gsr_layer_batched.1} parent=5 // pred_fallthru
      _
    %p199 = scmp.le.s32.totalorder 1, %s12
    %p200 = scmp.lt.s32.totalorder %s12, 3
    %p201 = pnand %p199, %p200
    %p202 = pneg %p201
    // Predicated region
    $region33: #{gsr_layer_batched.1} parent=5 // pred_check
      _
    $region34: #{gsr_layer_batched.1} parent=5 // pred_check_branch
      %204 = sbr.rel (%p201) target = $region36
    $region35: #{gsr_layer_batched.1} parent=5 // pred_region
      %s205 = ssub.s32 %s12, 1
      %p206 = pneg %p33
      %p207 = pneg %p30
      %p208 = pneg %p54
      %p209 = pneg %p51
      %p210 = scmp.lt.s32.totalorder %s17, 1
      %s211 = scalar_select %p210, %s17, 1
      %s212 = smul.addr %s211, 16
      %s213 = smul.addr %s212, 8
      %s214 = scalar_lea.vmem %s2, %s213
      %p215 = pneg %p80
      %p216 = pneg %p77
      %p217 = scmp.lt.s32.totalorder %s17, 1
      %s218 = scalar_select %p217, %s17, 1
      %s219 = smul.addr %s218, 16
      %s220 = smul.addr %s219, 8
      %s221 = scalar_lea.vmem %s3, %s220
      %p222 = pneg %p106
      %p223 = pneg %p103
      %p224 = pneg %p132
      %p225 = pneg %p129
      %p226 = scmp.lt.s32.totalorder %s17, 1
      %s227 = scalar_select %p226, %s17, 1
      %s228 = smul.addr %s227, 16
      %s229 = smul.addr %s228, 8
      %s230 = scalar_lea.vmem %s4, %s229
      %p231 = pneg %p158
      %p232 = pneg %p155
      %p233 = scmp.lt.s32.totalorder %s17, 1
      %s234 = scalar_select %p233, %s17, 1
      %s235 = smul.addr %s234, 16
      %s236 = smul.addr %s235, 8
      %s237 = scalar_lea.vmem %s5, %s236
      %p238 = scmp.lt.s32.totalorder %s17, 1
      %s239 = scalar_select %p238, %s17, 1
      %s240 = smul.addr %s239, 16
      %s241 = smul.addr %s240, 8
      %s242 = scalar_lea.vmem %s2, %s241
      %p243 = scmp.lt.s32.totalorder %s17, 1
      %s244 = scalar_select %p243, %s17, 1
      %s245 = smul.addr %s244, 16
      %s246 = smul.addr %s245, 8
      %s247 = scalar_lea.vmem %s3, %s246
      %p248 = scmp.lt.s32.totalorder %s17, 1
      %s249 = scalar_select %p248, %s17, 1
      %s250 = smul.addr %s249, 16
      %s251 = smul.addr %s250, 8
      %s252 = scalar_lea.vmem %s4, %s251
      %p253 = scmp.lt.s32.totalorder %s17, 1
      %s254 = scalar_select %p253, %s17, 1
      %s255 = smul.addr %s254, 16
      %s256 = smul.addr %s255, 8
      %s257 = scalar_lea.vmem %s5, %s256
      %v258 = vld [vmem:[%s0] sm:$0xff]
      %v259 = vld [vmem:[%s0 + $0x8] sm:$0xff]
      %v260 = vld [vmem:[%s0 + $0x10] sm:$0xff]
      %v261 = vld [vmem:[%s0 + $0x18] sm:$0xff]
      %v262 = vld [vmem:[%s0 + $0x20] sm:$0xff]
      %v263 = vld [vmem:[%s0 + $0x28] sm:$0xff]
      %v264 = vld [vmem:[%s0 + $0x30] sm:$0xff]
      %v265 = vld [vmem:[%s0 + $0x38] sm:$0xff]
      %v266 = vld [vmem:[%s0 + $0x40] sm:$0xff]
      %v267 = vld [vmem:[%s0 + $0x48] sm:$0xff]
      %v268 = vld [vmem:[%s0 + $0x50] sm:$0xff]
      %v269 = vld [vmem:[%s0 + $0x58] sm:$0xff]
      %v270 = vld [vmem:[%s0 + $0x60] sm:$0xff]
      %v271 = vld [vmem:[%s0 + $0x68] sm:$0xff]
      %v272 = vld [vmem:[%s0 + $0x70] sm:$0xff]
      %v273 = vld [vmem:[%s0 + $0x78] sm:$0xff]
      %v274 = vld [vmem:[%s1] sm:$0xff]
      %v275 = vld [vmem:[%s1 + $0x8] sm:$0xff]
      %v276 = vld [vmem:[%s1 + $0x10] sm:$0xff]
      %v277 = vld [vmem:[%s1 + $0x18] sm:$0xff]
      %v278 = vld [vmem:[%s1 + $0x20] sm:$0xff]
      %v279 = vld [vmem:[%s1 + $0x28] sm:$0xff]
      %v280 = vld [vmem:[%s1 + $0x30] sm:$0xff]
      %v281 = vld [vmem:[%s1 + $0x38] sm:$0xff]
      %v282 = vld [vmem:[%s1 + $0x40] sm:$0xff]
      %v283 = vld [vmem:[%s1 + $0x48] sm:$0xff]
      %v284 = vld [vmem:[%s1 + $0x50] sm:$0xff]
      %v285 = vld [vmem:[%s1 + $0x58] sm:$0xff]
      %v286 = vld [vmem:[%s1 + $0x60] sm:$0xff]
      %v287 = vld [vmem:[%s1 + $0x68] sm:$0xff]
      %v288 = vld [vmem:[%s1 + $0x70] sm:$0xff]
      %v289 = vld [vmem:[%s1 + $0x78] sm:$0xff]
      %v290 = vld [vmem:[%s242] sm:$0xff]
      %v291 = vld [vmem:[%s242 + $0x8] sm:$0xff]
      %v292 = vld [vmem:[%s242 + $0x10] sm:$0xff]
      %v293 = vld [vmem:[%s242 + $0x18] sm:$0xff]
      %v294 = vld [vmem:[%s242 + $0x20] sm:$0xff]
      %v295 = vld [vmem:[%s242 + $0x28] sm:$0xff]
      %v296 = vld [vmem:[%s242 + $0x30] sm:$0xff]
      %v297 = vld [vmem:[%s242 + $0x38] sm:$0xff]
      %v298 = vld [vmem:[%s242 + $0x40] sm:$0xff]
      %v299 = vld [vmem:[%s242 + $0x48] sm:$0xff]
      %v300 = vld [vmem:[%s242 + $0x50] sm:$0xff]
      %v301 = vld [vmem:[%s242 + $0x58] sm:$0xff]
      %v302 = vld [vmem:[%s242 + $0x60] sm:$0xff]
      %v303 = vld [vmem:[%s242 + $0x68] sm:$0xff]
      %v304 = vld [vmem:[%s242 + $0x70] sm:$0xff]
      %v305 = vld [vmem:[%s242 + $0x78] sm:$0xff]
      %v306 = vld [vmem:[%s247] sm:$0xff]
      %v307 = vld [vmem:[%s247 + $0x8] sm:$0xff]
      %v308 = vld [vmem:[%s247 + $0x10] sm:$0xff]
      %v309 = vld [vmem:[%s247 + $0x18] sm:$0xff]
      %v310 = vld [vmem:[%s247 + $0x20] sm:$0xff]
      %v311 = vld [vmem:[%s247 + $0x28] sm:$0xff]
      %v312 = vld [vmem:[%s247 + $0x30] sm:$0xff]
      %v313 = vld [vmem:[%s247 + $0x38] sm:$0xff]
      %v314 = vld [vmem:[%s247 + $0x40] sm:$0xff]
      %v315 = vld [vmem:[%s247 + $0x48] sm:$0xff]
      %v316 = vld [vmem:[%s247 + $0x50] sm:$0xff]
      %v317 = vld [vmem:[%s247 + $0x58] sm:$0xff]
      %v318 = vld [vmem:[%s247 + $0x60] sm:$0xff]
      %v319 = vld [vmem:[%s247 + $0x68] sm:$0xff]
      %v320 = vld [vmem:[%s247 + $0x70] sm:$0xff]
      %v321 = vld [vmem:[%s247 + $0x78] sm:$0xff]
      %v322 = vadd.f32 %v258, %v274
      %v323 = vadd.f32 %v259, %v275
      %v324 = vadd.f32 %v260, %v276
      %v325 = vadd.f32 %v261, %v277
      %v326 = vadd.f32 %v262, %v278
      %v327 = vadd.f32 %v263, %v279
      %v328 = vadd.f32 %v264, %v280
      %v329 = vadd.f32 %v265, %v281
      %v330 = vadd.f32 %v266, %v282
      %v331 = vadd.f32 %v267, %v283
      %v332 = vadd.f32 %v268, %v284
      %v333 = vadd.f32 %v269, %v285
      %v334 = vadd.f32 %v270, %v286
      %v335 = vadd.f32 %v271, %v287
      %v336 = vadd.f32 %v272, %v288
      %v337 = vadd.f32 %v273, %v289
      %338 = vmatprep.subr.mxu0 0.0
      %339 = vmatpush1.xpose.msra.mxu0 %v290
      %340 = vmatprep.subr.mxu0 0.0
      %341 = vmatpush1.xpose.msra.mxu0 %v291
      %342 = vmatprep.subr.mxu0 0.0
      %343 = vmatpush1.xpose.msra.mxu0 %v292
      %344 = vmatprep.subr.mxu0 0.0
      %345 = vmatpush1.xpose.msra.mxu0 %v293
      %346 = vmatprep.subr.mxu0 0.0
      %347 = vmatpush1.xpose.msra.mxu0 %v294
      %348 = vmatprep.subr.mxu0 0.0
      %349 = vmatpush1.xpose.msra.mxu0 %v295
      %350 = vmatprep.subr.mxu0 0.0
      %351 = vmatpush1.xpose.msra.mxu0 %v296
      %352 = vmatprep.subr.mxu0 0.0
      %353 = vmatpush1.xpose.msra.mxu0 %v297
      %354 = vmatprep.subr.mxu0 0.0
      %355 = vmatpush1.xpose.msra.mxu0 %v298
      %356 = vmatprep.subr.mxu0 0.0
      %357 = vmatpush1.xpose.msra.mxu0 %v299
      %358 = vmatprep.subr.mxu0 0.0
      %359 = vmatpush1.xpose.msra.mxu0 %v300
      %360 = vmatprep.subr.mxu0 0.0
      %361 = vmatpush1.xpose.msra.mxu0 %v301
      %362 = vmatprep.subr.mxu0 0.0
      %363 = vmatpush1.xpose.msra.mxu0 %v302
      %364 = vmatprep.subr.mxu0 0.0
      %365 = vmatpush1.xpose.msra.mxu0 %v303
      %366 = vmatprep.subr.mxu0 0.0
      %367 = vmatpush1.xpose.msra.mxu0 %v304
      %368 = vmatprep.subr.mxu0 0.0
      %369 = vmatpush1.xpose.msra.mxu0 %v305
      %370 = vmatprep.subr.mxu0 0.0
      %371 = vmatpush1.xpose.msra.mxu0 0.0
      %372 = vmatprep.subr.mxu0 0.0
      %373 = vmatpush1.xpose.msra.mxu0 0.0
      %374 = vmatprep.subr.mxu0 0.0
      %375 = vmatpush1.xpose.msra.mxu0 0.0
      %376 = vmatprep.subr.mxu0 0.0
      %377 = vmatpush1.xpose.msra.mxu0 0.0
      %378 = vmatprep.subr.mxu0 0.0
      %379 = vmatpush1.xpose.msra.mxu0 0.0
      %380 = vmatprep.subr.mxu0 0.0
      %381 = vmatpush1.xpose.msra.mxu0 0.0
      %382 = vmatprep.subr.mxu0 0.0
      %383 = vmatpush1.xpose.msra.mxu0 0.0
      %384 = vmatprep.subr.mxu0 0.0
      %385 = vmatpush1.xpose.msra.mxu0 0.0
      %386 = vmatprep.subr.mxu0 0.0
      %387 = vmatpush1.xpose.msra.mxu0 0.0
      %388 = vmatprep.subr.mxu0 0.0
      %389 = vmatpush1.xpose.msra.mxu0 0.0
      %390 = vmatprep.subr.mxu0 0.0
      %391 = vmatpush1.xpose.msra.mxu0 0.0
      %392 = vmatprep.subr.mxu0 0.0
      %393 = vmatpush1.xpose.msra.mxu0 0.0
      %394 = vmatprep.subr.mxu0 0.0
      %395 = vmatpush1.xpose.msra.mxu0 0.0
      %396 = vmatprep.subr.mxu0 0.0
      %397 = vmatpush1.xpose.msra.mxu0 0.0
      %398 = vmatprep.subr.mxu0 0.0
      %399 = vmatpush1.xpose.msra.mxu0 0.0
      %400 = vmatprep.subr.mxu0 0.0
      %401 = vmatpush1.xpose.msra.mxu0 0.0
      %402 = vmatprep.mubr.f32.mxu0 0.0
      %403 = vmatmul.mubr.f32.gmra.mrb[0].mxu0 %v322
      %v404 = vpop.f32.mrb[0].mxu0
      %v405 = vadd.f32 0.0, %v404
      %v406 = vpop.f32.mrb[0].mxu0
      %407 = vmatprep.mubr.f32.mxu0 0.0
      %408 = vmatmul.mubr.f32.gmra.mrb[0].mxu0 %v323
      %v409 = vpop.f32.mrb[0].mxu0
      %v410 = vadd.f32 0.0, %v409
      %v411 = vpop.f32.mrb[0].mxu0
      %412 = vmatprep.mubr.f32.mxu0 0.0
      %413 = vmatmul.mubr.f32.gmra.mrb[0].mxu0 %v324
      %v414 = vpop.f32.mrb[0].mxu0
      %v415 = vadd.f32 0.0, %v414
      %v416 = vpop.f32.mrb[0].mxu0
      %417 = vmatprep.mubr.f32.mxu0 0.0
      %418 = vmatmul.mubr.f32.gmra.mrb[0].mxu0 %v325
      %v419 = vpop.f32.mrb[0].mxu0
      %v420 = vadd.f32 0.0, %v419
      %v421 = vpop.f32.mrb[0].mxu0
      %422 = vmatprep.mubr.f32.mxu0 0.0
      %423 = vmatmul.mubr.f32.gmra.mrb[0].mxu0 %v326
      %v424 = vpop.f32.mrb[0].mxu0
      %v425 = vadd.f32 0.0, %v424
      %v426 = vpop.f32.mrb[0].mxu0
      %427 = vmatprep.mubr.f32.mxu0 0.0
      %428 = vmatmul.mubr.f32.gmra.mrb[0].mxu0 %v327
      %v429 = vpop.f32.mrb[0].mxu0
      %v430 = vadd.f32 0.0, %v429
      %v431 = vpop.f32.mrb[0].mxu0
      %432 = vmatprep.mubr.f32.mxu0 0.0
      %433 = vmatmul.mubr.f32.gmra.mrb[0].mxu0 %v328
      %v434 = vpop.f32.mrb[0].mxu0
      %v435 = vadd.f32 0.0, %v434
      %v436 = vpop.f32.mrb[0].mxu0
      %437 = vmatprep.mubr.f32.mxu0 0.0
      %438 = vmatmul.mubr.f32.gmra.mrb[0].mxu0 %v329
      %v439 = vpop.f32.mrb[0].mxu0
      %v440 = vadd.f32 0.0, %v439
      %v441 = vpop.f32.mrb[0].mxu0
      %442 = vmatprep.mubr.f32.mxu0 0.0
      %443 = vmatmul.mubr.f32.gmra.mrb[0].mxu0 %v330
      %v444 = vpop.f32.mrb[0].mxu0
      %v445 = vadd.f32 0.0, %v444
      %v446 = vpop.f32.mrb[0].mxu0
      %447 = vmatprep.mubr.f32.mxu0 0.0
      %448 = vmatmul.mubr.f32.gmra.mrb[0].mxu0 %v331
      %v449 = vpop.f32.mrb[0].mxu0
      %v450 = vadd.f32 0.0, %v449
      %v451 = vpop.f32.mrb[0].mxu0
      %452 = vmatprep.mubr.f32.mxu0 0.0
      %453 = vmatmul.mubr.f32.gmra.mrb[0].mxu0 %v332
      %v454 = vpop.f32.mrb[0].mxu0
      %v455 = vadd.f32 0.0, %v454
      %v456 = vpop.f32.mrb[0].mxu0
      %457 = vmatprep.mubr.f32.mxu0 0.0
      %458 = vmatmul.mubr.f32.gmra.mrb[0].mxu0 %v333
      %v459 = vpop.f32.mrb[0].mxu0
      %v460 = vadd.f32 0.0, %v459
      %v461 = vpop.f32.mrb[0].mxu0
      %462 = vmatprep.mubr.f32.mxu0 0.0
      %463 = vmatmul.mubr.f32.gmra.mrb[0].mxu0 %v334
      %v464 = vpop.f32.mrb[0].mxu0
      %v465 = vadd.f32 0.0, %v464
      %v466 = vpop.f32.mrb[0].mxu0
      %467 = vmatprep.mubr.f32.mxu0 0.0
      %468 = vmatmul.mubr.f32.gmra.mrb[0].mxu0 %v335
      %v469 = vpop.f32.mrb[0].mxu0
      %v470 = vadd.f32 0.0, %v469
      %v471 = vpop.f32.mrb[0].mxu0
      %472 = vmatprep.mubr.f32.mxu0 0.0
      %473 = vmatmul.mubr.f32.gmra.mrb[0].mxu0 %v336
      %v474 = vpop.f32.mrb[0].mxu0
      %v475 = vadd.f32 0.0, %v474
      %v476 = vpop.f32.mrb[0].mxu0
      %477 = vmatprep.mubr.f32.mxu0 0.0
      %478 = vmatmul.mubr.f32.gmra.mrb[0].mxu0 %v337
      %v479 = vpop.f32.mrb[0].mxu0
      %v480 = vadd.f32 0.0, %v479
      %v481 = vpop.f32.mrb[0].mxu0
      %482 = vdwg.mxu0
      %483 = vmatprep.subr.mxu0 0.0
      %484 = vmatpush1.msra.mxu0 %v306
      %485 = vmatprep.subr.mxu0 0.0
      %486 = vmatpush1.msra.mxu0 %v307
      %487 = vmatprep.subr.mxu0 0.0
      %488 = vmatpush1.msra.mxu0 %v308
      %489 = vmatprep.subr.mxu0 0.0
      %490 = vmatpush1.msra.mxu0 %v309
      %491 = vmatprep.subr.mxu0 0.0
      %492 = vmatpush1.msra.mxu0 %v310
      %493 = vmatprep.subr.mxu0 0.0
      %494 = vmatpush1.msra.mxu0 %v311
      %495 = vmatprep.subr.mxu0 0.0
      %496 = vmatpush1.msra.mxu0 %v312
      %497 = vmatprep.subr.mxu0 0.0
      %498 = vmatpush1.msra.mxu0 %v313
      %499 = vmatprep.subr.mxu0 0.0
      %500 = vmatpush1.msra.mxu0 %v314
      %501 = vmatprep.subr.mxu0 0.0
      %502 = vmatpush1.msra.mxu0 %v315
      %503 = vmatprep.subr.mxu0 0.0
      %504 = vmatpush1.msra.mxu0 %v316
      %505 = vmatprep.subr.mxu0 0.0
      %506 = vmatpush1.msra.mxu0 %v317
      %507 = vmatprep.subr.mxu0 0.0
      %508 = vmatpush1.msra.mxu0 %v318
      %509 = vmatprep.subr.mxu0 0.0
      %510 = vmatpush1.msra.mxu0 %v319
      %511 = vmatprep.subr.mxu0 0.0
      %512 = vmatpush1.msra.mxu0 %v320
      %513 = vmatprep.subr.mxu0 0.0
      %514 = vmatpush1.msra.mxu0 %v321
      %515 = vmatprep.subr.mxu0 0.0
      %516 = vmatpush1.msra.mxu0 0.0
      %517 = vmatprep.subr.mxu0 0.0
      %518 = vmatpush1.msra.mxu0 0.0
      %519 = vmatprep.subr.mxu0 0.0
      %520 = vmatpush1.msra.mxu0 0.0
      %521 = vmatprep.subr.mxu0 0.0
      %522 = vmatpush1.msra.mxu0 0.0
      %523 = vmatprep.subr.mxu0 0.0
      %524 = vmatpush1.msra.mxu0 0.0
      %525 = vmatprep.subr.mxu0 0.0
      %526 = vmatpush1.msra.mxu0 0.0
      %527 = vmatprep.subr.mxu0 0.0
      %528 = vmatpush1.msra.mxu0 0.0
      %529 = vmatprep.subr.mxu0 0.0
      %530 = vmatpush1.msra.mxu0 0.0
      %531 = vmatprep.subr.mxu0 0.0
      %532 = vmatpush1.msra.mxu0 0.0
      %533 = vmatprep.subr.mxu0 0.0
      %534 = vmatpush1.msra.mxu0 0.0
      %535 = vmatprep.subr.mxu0 0.0
      %536 = vmatpush1.msra.mxu0 0.0
      %537 = vmatprep.subr.mxu0 0.0
      %538 = vmatpush1.msra.mxu0 0.0
      %539 = vmatprep.subr.mxu0 0.0
      %540 = vmatpush1.msra.mxu0 0.0
      %541 = vmatprep.subr.mxu0 0.0
      %542 = vmatpush1.msra.mxu0 0.0
      %543 = vmatprep.subr.mxu0 0.0
      %544 = vmatpush1.msra.mxu0 0.0
      %545 = vmatprep.subr.mxu0 0.0
      %546 = vmatpush1.msra.mxu0 0.0
      %547 = vmatprep.mubr.f32.mxu0 0.0
      %548 = vmatmul.mubr.f32.gmra.mrb[0].mxu0 %v405
      %v549 = vpop.f32.mrb[0].mxu0
      %v550 = vadd.f32 0.0, %v549
      %v551 = vpop.f32.mrb[0].mxu0
      %552 = vmatprep.mubr.f32.mxu0 0.0
      %553 = vmatmul.mubr.f32.gmra.mrb[0].mxu0 %v410
      %v554 = vpop.f32.mrb[0].mxu0
      %v555 = vadd.f32 0.0, %v554
      %v556 = vpop.f32.mrb[0].mxu0
      %557 = vmatprep.mubr.f32.mxu0 0.0
      %558 = vmatmul.mubr.f32.gmra.mrb[0].mxu0 %v415
      %v559 = vpop.f32.mrb[0].mxu0
      %v560 = vadd.f32 0.0, %v559
      %v561 = vpop.f32.mrb[0].mxu0
      %562 = vmatprep.mubr.f32.mxu0 0.0
      %563 = vmatmul.mubr.f32.gmra.mrb[0].mxu0 %v420
      %v564 = vpop.f32.mrb[0].mxu0
      %v565 = vadd.f32 0.0, %v564
      %v566 = vpop.f32.mrb[0].mxu0
      %567 = vmatprep.mubr.f32.mxu0 0.0
      %568 = vmatmul.mubr.f32.gmra.mrb[0].mxu0 %v425
      %v569 = vpop.f32.mrb[0].mxu0
      %v570 = vadd.f32 0.0, %v569
      %v571 = vpop.f32.mrb[0].mxu0
      %572 = vmatprep.mubr.f32.mxu0 0.0
      %573 = vmatmul.mubr.f32.gmra.mrb[0].mxu0 %v430
      %v574 = vpop.f32.mrb[0].mxu0
      %v575 = vadd.f32 0.0, %v574
      %v576 = vpop.f32.mrb[0].mxu0
      %577 = vmatprep.mubr.f32.mxu0 0.0
      %578 = vmatmul.mubr.f32.gmra.mrb[0].mxu0 %v435
      %v579 = vpop.f32.mrb[0].mxu0
      %v580 = vadd.f32 0.0, %v579
      %v581 = vpop.f32.mrb[0].mxu0
      %582 = vmatprep.mubr.f32.mxu0 0.0
      %583 = vmatmul.mubr.f32.gmra.mrb[0].mxu0 %v440
      %v584 = vpop.f32.mrb[0].mxu0
      %v585 = vadd.f32 0.0, %v584
      %v586 = vpop.f32.mrb[0].mxu0
      %587 = vmatprep.mubr.f32.mxu0 0.0
      %588 = vmatmul.mubr.f32.gmra.mrb[0].mxu0 %v445
      %v589 = vpop.f32.mrb[0].mxu0
      %v590 = vadd.f32 0.0, %v589
      %v591 = vpop.f32.mrb[0].mxu0
      %592 = vmatprep.mubr.f32.mxu0 0.0
      %593 = vmatmul.mubr.f32.gmra.mrb[0].mxu0 %v450
      %v594 = vpop.f32.mrb[0].mxu0
      %v595 = vadd.f32 0.0, %v594
      %v596 = vpop.f32.mrb[0].mxu0
      %597 = vmatprep.mubr.f32.mxu0 0.0
      %598 = vmatmul.mubr.f32.gmra.mrb[0].mxu0 %v455
      %v599 = vpop.f32.mrb[0].mxu0
      %v600 = vadd.f32 0.0, %v599
      %v601 = vpop.f32.mrb[0].mxu0
      %602 = vmatprep.mubr.f32.mxu0 0.0
      %603 = vmatmul.mubr.f32.gmra.mrb[0].mxu0 %v460
      %v604 = vpop.f32.mrb[0].mxu0
      %v605 = vadd.f32 0.0, %v604
      %v606 = vpop.f32.mrb[0].mxu0
      %607 = vmatprep.mubr.f32.mxu0 0.0
      %608 = vmatmul.mubr.f32.gmra.mrb[0].mxu0 %v465
      %v609 = vpop.f32.mrb[0].mxu0
      %v610 = vadd.f32 0.0, %v609
      %v611 = vpop.f32.mrb[0].mxu0
      %612 = vmatprep.mubr.f32.mxu0 0.0
      %613 = vmatmul.mubr.f32.gmra.mrb[0].mxu0 %v470
      %v614 = vpop.f32.mrb[0].mxu0
      %v615 = vadd.f32 0.0, %v614
      %v616 = vpop.f32.mrb[0].mxu0
      %617 = vmatprep.mubr.f32.mxu0 0.0
      %618 = vmatmul.mubr.f32.gmra.mrb[0].mxu0 %v475
      %v619 = vpop.f32.mrb[0].mxu0
      %v620 = vadd.f32 0.0, %v619
      %v621 = vpop.f32.mrb[0].mxu0
      %622 = vmatprep.mubr.f32.mxu0 0.0
      %623 = vmatmul.mubr.f32.gmra.mrb[0].mxu0 %v480
      %v624 = vpop.f32.mrb[0].mxu0
      %v625 = vadd.f32 0.0, %v624
      %v626 = vpop.f32.mrb[0].mxu0
      %627 = vdwg.mxu0
      %v628 = vand.u32 2147483647, %v550
      %v629 = vand.u32 2147483647, %v555
      %v630 = vand.u32 2147483647, %v560
      %v631 = vand.u32 2147483647, %v565
      %v632 = vand.u32 2147483647, %v570
      %v633 = vand.u32 2147483647, %v575
      %v634 = vand.u32 2147483647, %v580
      %v635 = vand.u32 2147483647, %v585
      %v636 = vand.u32 2147483647, %v590
      %v637 = vand.u32 2147483647, %v595
      %v638 = vand.u32 2147483647, %v600
      %v639 = vand.u32 2147483647, %v605
      %v640 = vand.u32 2147483647, %v610
      %v641 = vand.u32 2147483647, %v615
      %v642 = vand.u32 2147483647, %v620
      %v643 = vand.u32 2147483647, %v625
      %v644 = vlaneseq
      %v645 = vshrl.u32 %v644, 7
      %v646 = vadd.s32 %v645, 8
      %v647 = vadd.s32 %v645, 16
      %v648 = vadd.s32 %v645, 24
      %v649 = vadd.s32 %v645, 32
      %v650 = vadd.s32 %v645, 40
      %v651 = vadd.s32 %v645, 48
      %v652 = vadd.s32 %v645, 56
      %v653 = vadd.s32 %v645, 64
      %v654 = vadd.s32 %v645, 72
      %v655 = vadd.s32 %v645, 80
      %v656 = vadd.s32 %v645, 88
      %v657 = vadd.s32 %v645, 96
      %v658 = vadd.s32 %v645, 104
      %v659 = vadd.s32 %v645, 112
      %v660 = vadd.s32 %v645, 120
      %v661 = vlaneseq
      %v662 = vand.u32 %v661, 127
      %vm663 = vcmp.eq.s32.totalorder %v645, %v662
      %vm664 = vcmp.eq.s32.totalorder %v646, %v662
      %vm665 = vcmp.eq.s32.totalorder %v647, %v662
      %vm666 = vcmp.eq.s32.totalorder %v648, %v662
      %vm667 = vcmp.eq.s32.totalorder %v649, %v662
      %vm668 = vcmp.eq.s32.totalorder %v650, %v662
      %vm669 = vcmp.eq.s32.totalorder %v651, %v662
      %vm670 = vcmp.eq.s32.totalorder %v652, %v662
      %vm671 = vcmp.eq.s32.totalorder %v653, %v662
      %vm672 = vcmp.eq.s32.totalorder %v654, %v662
      %vm673 = vcmp.eq.s32.totalorder %v655, %v662
      %vm674 = vcmp.eq.s32.totalorder %v656, %v662
      %vm675 = vcmp.eq.s32.totalorder %v657, %v662
      %vm676 = vcmp.eq.s32.totalorder %v658, %v662
      %vm677 = vcmp.eq.s32.totalorder %v659, %v662
      %vm678 = vcmp.eq.s32.totalorder %v660, %v662
      %v679 = vsel %vm663, 1.0, %v628
      %v680 = vsel %vm664, 1.0, %v629
      %v681 = vsel %vm665, 1.0, %v630
      %v682 = vsel %vm666, 1.0, %v631
      %v683 = vsel %vm667, 1.0, %v632
      %v684 = vsel %vm668, 1.0, %v633
      %v685 = vsel %vm669, 1.0, %v634
      %v686 = vsel %vm670, 1.0, %v635
      %v687 = vsel %vm671, 1.0, %v636
      %v688 = vsel %vm672, 1.0, %v637
      %v689 = vsel %vm673, 1.0, %v638
      %v690 = vsel %vm674, 1.0, %v639
      %v691 = vsel %vm675, 1.0, %v640
      %v692 = vsel %vm676, 1.0, %v641
      %v693 = vsel %vm677, 1.0, %v642
      %v694 = vsel %vm678, 1.0, %v643
      %695 = vadd.xlane.f32.xlu0 %v679
      %v696 = vpop.xlane.xlu0 %695
      %697 = vadd.xlane.f32.xlu0 %v680
      %v698 = vpop.xlane.xlu0 %697
      %699 = vadd.xlane.f32.xlu0 %v681
      %v700 = vpop.xlane.xlu0 %699
      %701 = vadd.xlane.f32.xlu0 %v682
      %v702 = vpop.xlane.xlu0 %701
      %703 = vadd.xlane.f32.xlu0 %v683
      %v704 = vpop.xlane.xlu0 %703
      %705 = vadd.xlane.f32.xlu0 %v684
      %v706 = vpop.xlane.xlu0 %705
      %707 = vadd.xlane.f32.xlu0 %v685
      %v708 = vpop.xlane.xlu0 %707
      %709 = vadd.xlane.f32.xlu0 %v686
      %v710 = vpop.xlane.xlu0 %709
      %711 = vadd.xlane.f32.xlu0 %v687
      %v712 = vpop.xlane.xlu0 %711
      %713 = vadd.xlane.f32.xlu0 %v688
      %v714 = vpop.xlane.xlu0 %713
      %715 = vadd.xlane.f32.xlu0 %v689
      %v716 = vpop.xlane.xlu0 %715
      %717 = vadd.xlane.f32.xlu0 %v690
      %v718 = vpop.xlane.xlu0 %717
      %719 = vadd.xlane.f32.xlu0 %v691
      %v720 = vpop.xlane.xlu0 %719
      %721 = vadd.xlane.f32.xlu0 %v692
      %v722 = vpop.xlane.xlu0 %721
      %723 = vadd.xlane.f32.xlu0 %v693
      %v724 = vpop.xlane.xlu0 %723
      %725 = vadd.xlane.f32.xlu0 %v694
      %v726 = vpop.xlane.xlu0 %725
      %v727 = vrsqrt.pop %v696
      %v728 = vrsqrt.pop %v698
      %v729 = vrsqrt.pop %v700
      %v730 = vrsqrt.pop %v702
      %v731 = vrsqrt.pop %v704
      %v732 = vrsqrt.pop %v706
      %v733 = vrsqrt.pop %v708
      %v734 = vrsqrt.pop %v710
      %v735 = vrsqrt.pop %v712
      %v736 = vrsqrt.pop %v714
      %v737 = vrsqrt.pop %v716
      %v738 = vrsqrt.pop %v718
      %v739 = vrsqrt.pop %v720
      %v740 = vrsqrt.pop %v722
      %v741 = vrsqrt.pop %v724
      %v742 = vrsqrt.pop %v726
      %v743 = vmul.f32 %v679, %v727
      %v744 = vmul.f32 %v680, %v728
      %v745 = vmul.f32 %v681, %v729
      %v746 = vmul.f32 %v682, %v730
      %v747 = vmul.f32 %v683, %v731
      %v748 = vmul.f32 %v684, %v732
      %v749 = vmul.f32 %v685, %v733
      %v750 = vmul.f32 %v686, %v734
      %v751 = vmul.f32 %v687, %v735
      %v752 = vmul.f32 %v688, %v736
      %v753 = vmul.f32 %v689, %v737
      %v754 = vmul.f32 %v690, %v738
      %v755 = vmul.f32 %v691, %v739
      %v756 = vmul.f32 %v692, %v740
      %v757 = vmul.f32 %v693, %v741
      %v758 = vmul.f32 %v694, %v742
      %759 = vxpose.xlu0.b32.start [1/16] %v743, 128
      %760 = vxpose.xlu0.b32.cont [2/16] %v744, 128
      %761 = vxpose.xlu0.b32.cont [3/16] %v745, 128
      %762 = vxpose.xlu0.b32.cont [4/16] %v746, 128
      %763 = vxpose.xlu0.b32.cont [5/16] %v747, 128
      %764 = vxpose.xlu0.b32.cont [6/16] %v748, 128
      %765 = vxpose.xlu0.b32.cont [7/16] %v749, 128
      %766 = vxpose.xlu0.b32.cont [8/16] %v750, 128
      %767 = vxpose.xlu0.b32.cont [9/16] %v751, 128
      %768 = vxpose.xlu0.b32.cont [10/16] %v752, 128
      %769 = vxpose.xlu0.b32.cont [11/16] %v753, 128
      %770 = vxpose.xlu0.b32.cont [12/16] %v754, 128
      %771 = vxpose.xlu0.b32.cont [13/16] %v755, 128
      %772 = vxpose.xlu0.b32.cont [14/16] %v756, 128
      %773 = vxpose.xlu0.b32.cont [15/16] %v757, 128
      %774 = vxpose.xlu0.b32.end [16/16] %v758, 128
      %v775 = vpop.trf.xlu0
      %v776 = vpop.trf.xlu0
      %v777 = vpop.trf.xlu0
      %v778 = vpop.trf.xlu0
      %v779 = vpop.trf.xlu0
      %v780 = vpop.trf.xlu0
      %v781 = vpop.trf.xlu0
      %v782 = vpop.trf.xlu0
      %v783 = vpop.trf.xlu0
      %v784 = vpop.trf.xlu0
      %v785 = vpop.trf.xlu0
      %v786 = vpop.trf.xlu0
      %v787 = vpop.trf.xlu0
      %v788 = vpop.trf.xlu0
      %v789 = vpop.trf.xlu0
      %v790 = vpop.trf.xlu0
      %v791 = vmul.f32 %v775, %v727
      %v792 = vmul.f32 %v776, %v728
      %v793 = vmul.f32 %v777, %v729
      %v794 = vmul.f32 %v778, %v730
      %v795 = vmul.f32 %v779, %v731
      %v796 = vmul.f32 %v780, %v732
      %v797 = vmul.f32 %v781, %v733
      %v798 = vmul.f32 %v782, %v734
      %v799 = vmul.f32 %v783, %v735
      %v800 = vmul.f32 %v784, %v736
      %v801 = vmul.f32 %v785, %v737
      %v802 = vmul.f32 %v786, %v738
      %v803 = vmul.f32 %v787, %v739
      %v804 = vmul.f32 %v788, %v740
      %v805 = vmul.f32 %v789, %v741
      %v806 = vmul.f32 %v790, %v742
      %807 = vst [vmem:[%s252] sm:$0xff] %v791
      %808 = vst [vmem:[%s252 + $0x8] sm:$0xff] %v792
      %809 = vst [vmem:[%s252 + $0x10] sm:$0xff] %v793
      %810 = vst [vmem:[%s252 + $0x18] sm:$0xff] %v794
      %811 = vst [vmem:[%s252 + $0x20] sm:$0xff] %v795
      %812 = vst [vmem:[%s252 + $0x28] sm:$0xff] %v796
      %813 = vst [vmem:[%s252 + $0x30] sm:$0xff] %v797
      %814 = vst [vmem:[%s252 + $0x38] sm:$0xff] %v798
      %815 = vst [vmem:[%s252 + $0x40] sm:$0xff] %v799
      %816 = vst [vmem:[%s252 + $0x48] sm:$0xff] %v800
      %817 = vst [vmem:[%s252 + $0x50] sm:$0xff] %v801
      %818 = vst [vmem:[%s252 + $0x58] sm:$0xff] %v802
      %819 = vst [vmem:[%s252 + $0x60] sm:$0xff] %v803
      %820 = vst [vmem:[%s252 + $0x68] sm:$0xff] %v804
      %821 = vst [vmem:[%s252 + $0x70] sm:$0xff] %v805
      %822 = vst [vmem:[%s252 + $0x78] sm:$0xff] %v806
      %823 = vmatprep.subr.mxu0 0.0
      %824 = vmatpush1.xpose.msra.mxu0 %v791
      %825 = vmatprep.subr.mxu0 0.0
      %826 = vmatpush1.xpose.msra.mxu0 %v792
      %827 = vmatprep.subr.mxu0 0.0
      %828 = vmatpush1.xpose.msra.mxu0 %v793
      %829 = vmatprep.subr.mxu0 0.0
      %830 = vmatpush1.xpose.msra.mxu0 %v794
      %831 = vmatprep.subr.mxu0 0.0
      %832 = vmatpush1.xpose.msra.mxu0 %v795
      %833 = vmatprep.subr.mxu0 0.0
      %834 = vmatpush1.xpose.msra.mxu0 %v796
      %835 = vmatprep.subr.mxu0 0.0
      %836 = vmatpush1.xpose.msra.mxu0 %v797
      %837 = vmatprep.subr.mxu0 0.0
      %838 = vmatpush1.xpose.msra.mxu0 %v798
      %839 = vmatprep.subr.mxu0 0.0
      %840 = vmatpush1.xpose.msra.mxu0 %v799
      %841 = vmatprep.subr.mxu0 0.0
      %842 = vmatpush1.xpose.msra.mxu0 %v800
      %843 = vmatprep.subr.mxu0 0.0
      %844 = vmatpush1.xpose.msra.mxu0 %v801
      %845 = vmatprep.subr.mxu0 0.0
      %846 = vmatpush1.xpose.msra.mxu0 %v802
      %847 = vmatprep.subr.mxu0 0.0
      %848 = vmatpush1.xpose.msra.mxu0 %v803
      %849 = vmatprep.subr.mxu0 0.0
      %850 = vmatpush1.xpose.msra.mxu0 %v804
      %851 = vmatprep.subr.mxu0 0.0
      %852 = vmatpush1.xpose.msra.mxu0 %v805
      %853 = vmatprep.subr.mxu0 0.0
      %854 = vmatpush1.xpose.msra.mxu0 %v806
      %855 = vmatprep.subr.mxu0 0.0
      %856 = vmatpush1.xpose.msra.mxu0 0.0
      %857 = vmatprep.subr.mxu0 0.0
      %858 = vmatpush1.xpose.msra.mxu0 0.0
      %859 = vmatprep.subr.mxu0 0.0
      %860 = vmatpush1.xpose.msra.mxu0 0.0
      %861 = vmatprep.subr.mxu0 0.0
      %862 = vmatpush1.xpose.msra.mxu0 0.0
      %863 = vmatprep.subr.mxu0 0.0
      %864 = vmatpush1.xpose.msra.mxu0 0.0
      %865 = vmatprep.subr.mxu0 0.0
      %866 = vmatpush1.xpose.msra.mxu0 0.0
      %867 = vmatprep.subr.mxu0 0.0
      %868 = vmatpush1.xpose.msra.mxu0 0.0
      %869 = vmatprep.subr.mxu0 0.0
      %870 = vmatpush1.xpose.msra.mxu0 0.0
      %871 = vmatprep.subr.mxu0 0.0
      %872 = vmatpush1.xpose.msra.mxu0 0.0
      %873 = vmatprep.subr.mxu0 0.0
      %874 = vmatpush1.xpose.msra.mxu0 0.0
      %875 = vmatprep.subr.mxu0 0.0
      %876 = vmatpush1.xpose.msra.mxu0 0.0
      %877 = vmatprep.subr.mxu0 0.0
      %878 = vmatpush1.xpose.msra.mxu0 0.0
      %879 = vmatprep.subr.mxu0 0.0
      %880 = vmatpush1.xpose.msra.mxu0 0.0
      %881 = vmatprep.subr.mxu0 0.0
      %882 = vmatpush1.xpose.msra.mxu0 0.0
      %883 = vmatprep.subr.mxu0 0.0
      %884 = vmatpush1.xpose.msra.mxu0 0.0
      %885 = vmatprep.subr.mxu0 0.0
      %886 = vmatpush1.xpose.msra.mxu0 0.0
      %887 = vmatprep.mubr.f32.mxu0 0.0
      %888 = vmatmul.mubr.f32.gmra.mrb[0].mxu0 %v791
      %v889 = vpop.f32.mrb[0].mxu0
      %v890 = vadd.f32 0.0, %v889
      %v891 = vpop.f32.mrb[0].mxu0
      %892 = vmatprep.mubr.f32.mxu0 0.0
      %893 = vmatmul.mubr.f32.gmra.mrb[0].mxu0 %v792
      %v894 = vpop.f32.mrb[0].mxu0
      %v895 = vadd.f32 0.0, %v894
      %v896 = vpop.f32.mrb[0].mxu0
      %897 = vmatprep.mubr.f32.mxu0 0.0
      %898 = vmatmul.mubr.f32.gmra.mrb[0].mxu0 %v793
      %v899 = vpop.f32.mrb[0].mxu0
      %v900 = vadd.f32 0.0, %v899
      %v901 = vpop.f32.mrb[0].mxu0
      %902 = vmatprep.mubr.f32.mxu0 0.0
      %903 = vmatmul.mubr.f32.gmra.mrb[0].mxu0 %v794
      %v904 = vpop.f32.mrb[0].mxu0
      %v905 = vadd.f32 0.0, %v904
      %v906 = vpop.f32.mrb[0].mxu0
      %907 = vmatprep.mubr.f32.mxu0 0.0
      %908 = vmatmul.mubr.f32.gmra.mrb[0].mxu0 %v795
      %v909 = vpop.f32.mrb[0].mxu0
      %v910 = vadd.f32 0.0, %v909
      %v911 = vpop.f32.mrb[0].mxu0
      %912 = vmatprep.mubr.f32.mxu0 0.0
      %913 = vmatmul.mubr.f32.gmra.mrb[0].mxu0 %v796
      %v914 = vpop.f32.mrb[0].mxu0
      %v915 = vadd.f32 0.0, %v914
      %v916 = vpop.f32.mrb[0].mxu0
      %917 = vmatprep.mubr.f32.mxu0 0.0
      %918 = vmatmul.mubr.f32.gmra.mrb[0].mxu0 %v797
      %v919 = vpop.f32.mrb[0].mxu0
      %v920 = vadd.f32 0.0, %v919
      %v921 = vpop.f32.mrb[0].mxu0
      %922 = vmatprep.mubr.f32.mxu0 0.0
      %923 = vmatmul.mubr.f32.gmra.mrb[0].mxu0 %v798
      %v924 = vpop.f32.mrb[0].mxu0
      %v925 = vadd.f32 0.0, %v924
      %v926 = vpop.f32.mrb[0].mxu0
      %927 = vmatprep.mubr.f32.mxu0 0.0
      %928 = vmatmul.mubr.f32.gmra.mrb[0].mxu0 %v799
      %v929 = vpop.f32.mrb[0].mxu0
      %v930 = vadd.f32 0.0, %v929
      %v931 = vpop.f32.mrb[0].mxu0
      %932 = vmatprep.mubr.f32.mxu0 0.0
      %933 = vmatmul.mubr.f32.gmra.mrb[0].mxu0 %v800
      %v934 = vpop.f32.mrb[0].mxu0
      %v935 = vadd.f32 0.0, %v934
      %v936 = vpop.f32.mrb[0].mxu0
      %937 = vmatprep.mubr.f32.mxu0 0.0
      %938 = vmatmul.mubr.f32.gmra.mrb[0].mxu0 %v801
      %v939 = vpop.f32.mrb[0].mxu0
      %v940 = vadd.f32 0.0, %v939
      %v941 = vpop.f32.mrb[0].mxu0
      %942 = vmatprep.mubr.f32.mxu0 0.0
      %943 = vmatmul.mubr.f32.gmra.mrb[0].mxu0 %v802
      %v944 = vpop.f32.mrb[0].mxu0
      %v945 = vadd.f32 0.0, %v944
      %v946 = vpop.f32.mrb[0].mxu0
      %947 = vmatprep.mubr.f32.mxu0 0.0
      %948 = vmatmul.mubr.f32.gmra.mrb[0].mxu0 %v803
      %v949 = vpop.f32.mrb[0].mxu0
      %v950 = vadd.f32 0.0, %v949
      %v951 = vpop.f32.mrb[0].mxu0
      %952 = vmatprep.mubr.f32.mxu0 0.0
      %953 = vmatmul.mubr.f32.gmra.mrb[0].mxu0 %v804
      %v954 = vpop.f32.mrb[0].mxu0
      %v955 = vadd.f32 0.0, %v954
      %v956 = vpop.f32.mrb[0].mxu0
      %957 = vmatprep.mubr.f32.mxu0 0.0
      %958 = vmatmul.mubr.f32.gmra.mrb[0].mxu0 %v805
      %v959 = vpop.f32.mrb[0].mxu0
      %v960 = vadd.f32 0.0, %v959
      %v961 = vpop.f32.mrb[0].mxu0
      %962 = vmatprep.mubr.f32.mxu0 0.0
      %963 = vmatmul.mubr.f32.gmra.mrb[0].mxu0 %v806
      %v964 = vpop.f32.mrb[0].mxu0
      %v965 = vadd.f32 0.0, %v964
      %v966 = vpop.f32.mrb[0].mxu0
      %967 = vdwg.mxu0
      %v968 = vsel %vm663, 1.0, %v890
      %v969 = vsel %vm664, 1.0, %v895
      %v970 = vsel %vm665, 1.0, %v900
      %v971 = vsel %vm666, 1.0, %v905
      %v972 = vsel %vm667, 1.0, %v910
      %v973 = vsel %vm668, 1.0, %v915
      %v974 = vsel %vm669, 1.0, %v920
      %v975 = vsel %vm670, 1.0, %v925
      %v976 = vsel %vm671, 1.0, %v930
      %v977 = vsel %vm672, 1.0, %v935
      %v978 = vsel %vm673, 1.0, %v940
      %v979 = vsel %vm674, 1.0, %v945
      %v980 = vsel %vm675, 1.0, %v950
      %v981 = vsel %vm676, 1.0, %v955
      %v982 = vsel %vm677, 1.0, %v960
      %v983 = vsel %vm678, 1.0, %v965
      %v984 = vand.u32 2147483647, %v968
      %v985 = vand.u32 2147483647, %v969
      %v986 = vand.u32 2147483647, %v970
      %v987 = vand.u32 2147483647, %v971
      %v988 = vand.u32 2147483647, %v972
      %v989 = vand.u32 2147483647, %v973
      %v990 = vand.u32 2147483647, %v974
      %v991 = vand.u32 2147483647, %v975
      %v992 = vand.u32 2147483647, %v976
      %v993 = vand.u32 2147483647, %v977
      %v994 = vand.u32 2147483647, %v978
      %v995 = vand.u32 2147483647, %v979
      %v996 = vand.u32 2147483647, %v980
      %v997 = vand.u32 2147483647, %v981
      %v998 = vand.u32 2147483647, %v982
      %v999 = vand.u32 2147483647, %v983
      %1000 = vst [vmem:[%s257] sm:$0xff] %v984
      %1001 = vst [vmem:[%s257 + $0x8] sm:$0xff] %v985
      %1002 = vst [vmem:[%s257 + $0x10] sm:$0xff] %v986
      %1003 = vst [vmem:[%s257 + $0x18] sm:$0xff] %v987
      %1004 = vst [vmem:[%s257 + $0x20] sm:$0xff] %v988
      %1005 = vst [vmem:[%s257 + $0x28] sm:$0xff] %v989
      %1006 = vst [vmem:[%s257 + $0x30] sm:$0xff] %v990
      %1007 = vst [vmem:[%s257 + $0x38] sm:$0xff] %v991
      %1008 = vst [vmem:[%s257 + $0x40] sm:$0xff] %v992
      %1009 = vst [vmem:[%s257 + $0x48] sm:$0xff] %v993
      %1010 = vst [vmem:[%s257 + $0x50] sm:$0xff] %v994
      %1011 = vst [vmem:[%s257 + $0x58] sm:$0xff] %v995
      %1012 = vst [vmem:[%s257 + $0x60] sm:$0xff] %v996
      %1013 = vst [vmem:[%s257 + $0x68] sm:$0xff] %v997
      %1014 = vst [vmem:[%s257 + $0x70] sm:$0xff] %v998
      %1015 = vst [vmem:[%s257 + $0x78] sm:$0xff] %v999
      %p1016 = scmp.lt.s32.totalorder %s17, 1
      %s1017 = scalar_select %p1016, %s17, 1
      %s1018 = smul.addr %s1017, 16
      %s1019 = smul.addr %s1018, 8
      %s1020 = scalar_lea.vmem %s4, %s1019
      %p1021 = scmp.lt.s32.totalorder %s17, 1
      %s1022 = scalar_select %p1021, %s17, 1
      %s1023 = smul.addr %s1022, 16
      %s1024 = smul.addr %s1023, 8
      %s1025 = scalar_lea.vmem %s5, %s1024
      // Predicated region
      $region37: #{gsr_layer_batched.1} parent=35 // pred_check
        %p1026 = pneg %p129
      $region38: #{gsr_layer_batched.1} parent=35 // pred_check_branch
        %1028 = sbr.rel (%p1026) target = $region40
      $region39: #{gsr_layer_batched.1} parent=35 // pred_region
        _
      $region40: #{gsr_layer_batched.1} parent=35 // pred_fallthru
        _
      // Predicated region
      $region41: #{gsr_layer_batched.1} parent=35 // pred_check
        %p1029 = pneg %p155
      $region42: #{gsr_layer_batched.1} parent=35 // pred_check_branch
        %1031 = sbr.rel (%p1029) target = $region44
      $region43: #{gsr_layer_batched.1} parent=35 // pred_region
        _
      $region44: #{gsr_layer_batched.1} parent=35 // pred_fallthru
        _
    $region36: #{gsr_layer_batched.1} parent=5 // pred_fallthru
      _
    %p1032 = scmp.le.s32.totalorder 2, %s12
    // Predicated region
    $region45: #{gsr_layer_batched.1} parent=5 // pred_check
      %p1033 = pneg %p1032
    $region46: #{gsr_layer_batched.1} parent=5 // pred_check_branch
      %1035 = sbr.rel (%p1033) target = $region48
    $region47: #{gsr_layer_batched.1} parent=5 // pred_region
      %s1036 = ssub.s32 %s12, 2
      // Predicated region
      $region49: #{gsr_layer_batched.1} parent=47 // pred_check
        %p1037 = pneg %p135
      $region50: #{gsr_layer_batched.1} parent=47 // pred_check_branch
        %1039 = sbr.rel (%p1037) target = $region52
      $region51: #{gsr_layer_batched.1} parent=47 // pred_region
        %p1040 = scmp.lt.s32.totalorder %s18, 1
        %s1041 = scalar_select %p1040, %s18, 1
        %s1042 = smul.addr %s1041, 16
        %s1043 = smul.addr %s1042, 8
        %s1044 = scalar_lea.vmem %s4, %s1043
      $region52: #{gsr_layer_batched.1} parent=47 // pred_fallthru
        _
      // Predicated region
      $region53: #{gsr_layer_batched.1} parent=47 // pred_check
        %p1045 = pneg %p161
      $region54: #{gsr_layer_batched.1} parent=47 // pred_check_branch
        %1047 = sbr.rel (%p1045) target = $region56
      $region55: #{gsr_layer_batched.1} parent=47 // pred_region
        %p1048 = scmp.lt.s32.totalorder %s18, 1
        %s1049 = scalar_select %p1048, %s18, 1
        %s1050 = smul.addr %s1049, 16
        %s1051 = smul.addr %s1050, 8
        %s1052 = scalar_lea.vmem %s5, %s1051
      $region56: #{gsr_layer_batched.1} parent=47 // pred_fallthru
        _
    $region48: #{gsr_layer_batched.1} parent=5 // pred_fallthru
      _
  $region6: #{gsr_layer_batched.1} parent=0 // loop_footer
    %s16 = sadd.s32 1, %s12
  $region7: #{gsr_layer_batched.1} parent=0 // loop_footer_branch
    %11 = sbr.rel target = $region3
  $region8: #{gsr_layer_batched.1} parent=0 // loop_exit
    _

</llo_original>
